<compile_context>
chip_gen: v5e
topology: v5e:2x2
jax: 0.10.0
libtpu: 0.0.40
codegen_flags: <defaults>
</compile_context>

<pallas_src>
import functools

import jax
import jax.numpy as jnp
from jax.experimental import pallas as pl
from jax.experimental.pallas import tpu as pltpu

EPS = 1e-5  # nn.BatchNorm2d default eps
VMEM_LIMIT = 32 * 1024 * 1024  # safe on v5e/v6e/v7x


def _round_up(x, m):
    return (x + m - 1) // m * m


# ---------------------------------------------------------------------------
# Pass 1: conv-as-matmul (MXU, bf16 in / f32 acc) + per-tile partial moments
# ---------------------------------------------------------------------------
def _matmul_stats_kernel(p_ref, w_ref, y_ref, sum_ref, sq_ref):
    y = jnp.dot(p_ref[...], w_ref[...], preferred_element_type=jnp.float32)
    y_ref[...] = y
    tm, cp = y.shape
    yg = y.reshape(tm // 8, 8, cp)              # sublane-aligned partial reduce
    sum_ref[...] = jnp.sum(yg, axis=0)          # (8, Cp) partial sum
    sq_ref[...] = jnp.sum(yg * yg, axis=0)      # (8, Cp) partial sum of squares


# ---------------------------------------------------------------------------
# Pass 2: folded BatchNorm (y*scale + shift) + optional ReLU + fused residual
# ---------------------------------------------------------------------------
def _norm_kernel(*refs, relu: bool, residual: bool):
    if residual:
        y_ref, sc_ref, sh_ref, r_ref, o_ref = refs
    else:
        y_ref, sc_ref, sh_ref, o_ref = refs
        r_ref = None
    out = y_ref[...] * sc_ref[...] + sh_ref[...]
    if relu:
        out = jnp.maximum(out, 0.0)
    if residual:
        out = out + r_ref[...]
    o_ref[...] = out


# ---------------------------------------------------------------------------
# Glue: reflect padding + im2col patch extraction (layout only, no compute)
# ---------------------------------------------------------------------------
def reflect_pad(x, p):
    if p == 0:
        return x
    return jnp.pad(x, ((0, 0), (p, p), (p, p), (0, 0)), mode="reflect")


def im2col(x, k, s, p):
    """x: (N, H, W, C) -> (N*Ho*Wo, k*k*C) patches, tap-major (dy, dx, c)."""
    xp = reflect_pad(x, p)
    N, Hp, Wp, C = xp.shape
    Ho = (Hp - k) // s + 1
    Wo = (Wp - k) // s + 1
    cols = []
    for dy in range(k):
        for dx in range(k):
            cols.append(xp[:, dy:dy + (Ho - 1) * s + 1:s,
                           dx:dx + (Wo - 1) * s + 1:s, :])
    patches = jnp.concatenate(cols, axis=-1)            # (N, Ho, Wo, k*k*C)
    return patches.reshape(N * Ho * Wo, k * k * C), Ho, Wo


# ---------------------------------------------------------------------------
# One Conv -> BN(train) -> (ReLU) [-> +residual] stage, tiled over M
# ---------------------------------------------------------------------------
def conv_bn_stage(x_img, w4, gamma, beta, *, k, s, p, relu,
                  residual_flat=None, block_m=512):
    assert block_m % 8 == 0
    N = x_img.shape[0]
    Cout = w4.shape[-1]

    # bf16 patches (halves the HBM footprint of the im2col expansion).
    patches, Ho, Wo = im2col(x_img.astype(jnp.bfloat16), k, s, p)
    M, K = patches.shape

    Cp = _round_up(Cout, 128)                   # lane-dense output channels
    TM = min(block_m, _round_up(M, 8))
    Mp = _round_up(M, TM)
    n_tiles = Mp // TM

    if Mp != M:                                 # zero rows: no effect on stats
        patches = jnp.pad(patches, ((0, Mp - M), (0, 0)))
    w = w4.reshape(-1, Cout).astype(jnp.bfloat16)
    if Cp != Cout:
        w = jnp.pad(w, ((0, 0), (0, Cp - Cout)))

    # ---- pass 1: matmul + partial moments (M axis fully parallel) ----------
    y_flat, psum, psq = pl.pallas_call(
        _matmul_stats_kernel,
        grid=(n_tiles,),
        in_specs=[pl.BlockSpec((TM, K), lambda i: (i, 0)),
                  pl.BlockSpec((K, Cp), lambda i: (0, 0))],
        out_specs=[pl.BlockSpec((TM, Cp), lambda i: (i, 0)),
                   pl.BlockSpec((8, Cp), lambda i: (i, 0)),
                   pl.BlockSpec((8, Cp), lambda i: (i, 0))],
        out_shape=[jax.ShapeDtypeStruct((Mp, Cp), jnp.float32),
                   jax.ShapeDtypeStruct((n_tiles * 8, Cp), jnp.float32),
                   jax.ShapeDtypeStruct((n_tiles * 8, Cp), jnp.float32)],
        compiler_params=pltpu.CompilerParams(
            dimension_semantics=("parallel",),
            vmem_limit_bytes=VMEM_LIMIT),
    )(patches, w)

    # ---- global training-mode BatchNorm statistics (over true N*H*W rows) --
    mu = jnp.sum(psum, axis=0) / M
    var = jnp.maximum(jnp.sum(psq, axis=0) / M - mu * mu, 0.0)
    g = jnp.pad(gamma.astype(jnp.float32), (0, Cp - Cout))
    b = jnp.pad(beta.astype(jnp.float32), (0, Cp - Cout))
    scale = g * jax.lax.rsqrt(var + EPS)
    shift = b - mu * scale
    scale = scale.reshape(1, Cp)
    shift = shift.reshape(1, Cp)

    # ---- pass 2: normalize (+ReLU, +residual), tiled & parallel -------------
    inputs = [y_flat, scale, shift]
    in_specs = [pl.BlockSpec((TM, Cp), lambda i: (i, 0)),
                pl.BlockSpec((1, Cp), lambda i: (0, 0)),
                pl.BlockSpec((1, Cp), lambda i: (0, 0))]
    if residual_flat is not None:
        assert residual_flat.shape == (Mp, Cp), (residual_flat.shape, (Mp, Cp))
        inputs.append(residual_flat)
        in_specs.append(pl.BlockSpec((TM, Cp), lambda i: (i, 0)))

    kernel = functools.partial(_norm_kernel, relu=relu,
                               residual=residual_flat is not None)
    out_flat = pl.pallas_call(
        kernel,
        grid=(n_tiles,),
        in_specs=in_specs,
        out_specs=pl.BlockSpec((TM, Cp), lambda i: (i, 0)),
        out_shape=jax.ShapeDtypeStruct((Mp, Cp), jnp.float32),
        compiler_params=pltpu.CompilerParams(
            dimension_semantics=("parallel",),
            vmem_limit_bytes=VMEM_LIMIT),
    )(*inputs)

    out_img = out_flat[:M, :Cout].reshape(N, Ho, Wo, Cout)
    return out_img, out_flat


# ---------------------------------------------------------------------------
# DownConvBlock forward:  down -> conv1 -> conv1_out + conv2(conv1_out)
# ---------------------------------------------------------------------------
def down_conv_block_forward(x_nchw, params, *, k_down, s_down, p_down,
                            block_m=512):
    x = jnp.transpose(x_nchw, (0, 2, 3, 1)).astype(jnp.float32)   # NCHW -> NHWC

    # down: Conv(d_in -> d_in, k_down, s_down, p_down, reflect) -> BN -> ReLU
    y_img, _ = conv_bn_stage(x, params["w_down"], params["g_down"],
                             params["bt_down"], k=k_down, s=s_down, p=p_down,
                             relu=True, block_m=block_m)

    # conv1: Conv(d_in -> d_out, 3, 1, 1, reflect) -> BN -> ReLU
    y1_img, y1_flat = conv_bn_stage(y_img, params["w1"], params["g1"],
                                    params["bt1"], k=3, s=1, p=1,
                                    relu=True, block_m=block_m)

    # conv2: Conv(d_out -> d_out, 3, 1, 1, reflect) -> BN (no ReLU),
    # residual fused into pass 2:  out = conv1_out + conv2(conv1_out)
    out_img, _ = conv_bn_stage(y1_img, params["w2"], params["g2"],
                               params["bt2"], k=3, s=1, p=1,
                               relu=False, residual_flat=y1_flat,
                               block_m=block_m)

    return jnp.transpose(out_img, (0, 3, 1, 2))                    # back to NCHW


# ---------------------------------------------------------------------------
# Deterministic parameter init (synthetic; matches module's parameter shapes).
# Conv biases are kept for the reference path, but the Pallas path omits them:
# a per-channel constant added before training-mode BatchNorm is exactly
# cancelled by the mean subtraction.
# ---------------------------------------------------------------------------
def init_params(key, d_in, d_out, k_down):
    ks = jax.random.split(key, 12)

    def conv_w(k_, ksize, cin, cout):
        std = (2.0 / (ksize * ksize * cin)) ** 0.5
        return std * jax.random.normal(k_, (ksize, ksize, cin, cout), jnp.float32)

    def vec(k_, c, center=0.0):
        return center + 0.1 * jax.random.normal(k_, (c,), jnp.float32)

    return dict(
        w_down=conv_w(ks[0], k_down, d_in, d_in),
        b_down=vec(ks[1], d_in), g_down=vec(ks[2], d_in, 1.0), bt_down=vec(ks[3], d_in),
        w1=conv_w(ks[4], 3, d_in, d_out),
        b1=vec(ks[5], d_out), g1=vec(ks[6], d_out, 1.0), bt1=vec(ks[7], d_out),
        w2=conv_w(ks[8], 3, d_out, d_out),
        b2=vec(ks[9], d_out), g2=vec(ks[10], d_out, 1.0), bt2=vec(ks[11], d_out),
    )


# ---------------------------------------------------------------------------
# Pure-JAX reference (independent path via lax.conv, f32 HIGHEST, with bias)
# ---------------------------------------------------------------------------
def ref_forward(x_nchw, params, *, k_down, s_down, p_down):
    x = jnp.transpose(x_nchw, (0, 2, 3, 1)).astype(jnp.float32)

    def conv_bn(z, w4, b, g, bt, s, p, relu):
        zp = reflect_pad(z, p)
        y = jax.lax.conv_general_dilated(
            zp, w4, (s, s), "VALID",
            dimension_numbers=("NHWC", "HWIO", "NHWC"),
            precision=jax.lax.Precision.HIGHEST) + b
        mu = jnp.mean(y, axis=(0, 1, 2), keepdims=True)
        var = jnp.mean(jnp.square(y - mu), axis=(0, 1, 2), keepdims=True)
        y = (y - mu) * jax.lax.rsqrt(var + EPS) * g + bt
        return jnp.maximum(y, 0.0) if relu else y

    y = conv_bn(x, params["w_down"], params["b_down"], params["g_down"],
                params["bt_down"], s_down, p_down, True)
    y1 = conv_bn(y, params["w1"], params["b1"], params["g1"], params["bt1"], 1, 1, True)
    y2 = conv_bn(y1, params["w2"], params["b2"], params["g2"], params["bt2"], 1, 1, False)
    return jnp.transpose(y1 + y2, (0, 3, 1, 2))


if __name__ == "__main__":
    N, D_IN, H, W = 2, 4, 16, 16
    D_OUT, K_DOWN, S_DOWN, P_DOWN = 8, 4, 2, 1

    key = jax.random.PRNGKey(0)
    kx, kp = jax.random.split(key)
    x = jax.random.normal(kx, (N, D_IN, H, W), jnp.float32)
    params = init_params(kp, D_IN, D_OUT, K_DOWN)

    # block_m=64 so the 128-row test problem exercises a real multi-tile grid
    # (production default would be 512-1024 rows per tile).
    fwd = jax.jit(functools.partial(down_conv_block_forward,
                                    k_down=K_DOWN, s_down=S_DOWN, p_down=P_DOWN,
                                    block_m=64))
    out = jax.block_until_ready(fwd(x, params))

    ref = ref_forward(x, params, k_down=K_DOWN, s_down=S_DOWN, p_down=P_DOWN)
    assert out.shape == (N, D_OUT, H // S_DOWN, W // S_DOWN), out.shape
    # bf16 MXU inputs (f32 accumulation): check with abs + relative tolerance.
    tol = 2e-2 + 2e-2 * jnp.abs(ref)
    max_err = float(jnp.max(jnp.abs(out - ref)))
    assert bool(jnp.all(jnp.abs(out - ref) <= tol)), f"max abs error {max_err}"

    print("KERNEL_OK")
</pallas_src>

<mosaic_0001>
module attributes {stable_mosaic.version = 11 : i64} {
  func.func @_matmul_stats_kernel(%arg0: i32, %arg1: memref<64x64xbf16, #tpu.memory_space<vmem>>, %arg2: memref<64x128xbf16, #tpu.memory_space<vmem>>, %arg3: memref<64x128xf32, #tpu.memory_space<vmem>>, %arg4: memref<8x128xf32, #tpu.memory_space<vmem>>, %arg5: memref<8x128xf32, #tpu.memory_space<vmem>>) attributes {dimension_semantics = [#tpu.dimension_semantics<parallel>], iteration_bounds = array<i64: 2>, scalar_prefetch = 0 : i64, scratch_operands = 0 : i64, tpu.core_type = #tpu.core_type<tc>, window_params = [{transform_indices = @transform_0, window_bounds = array<i64: 64, 64>}, {pipeline_mode = #tpu.pipeline_mode<synchronous>, transform_indices = @transform_1, window_bounds = array<i64: 64, 128>}, {transform_indices = @transform_2, window_bounds = array<i64: 64, 128>}, {transform_indices = @transform_3, window_bounds = array<i64: 8, 128>}, {transform_indices = @transform_4, window_bounds = array<i64: 8, 128>}]} {
    %c0 = arith.constant 0 : index
    %c0_0 = arith.constant 0 : index
    %0 = vector.load %arg1[%c0, %c0_0] : memref<64x64xbf16, #tpu.memory_space<vmem>>, vector<64x64xbf16>
    %c0_1 = arith.constant 0 : index
    %c0_2 = arith.constant 0 : index
    %1 = vector.load %arg2[%c0_1, %c0_2] : memref<64x128xbf16, #tpu.memory_space<vmem>>, vector<64x128xbf16>
    %cst = arith.constant dense<0.000000e+00> : vector<64x128xf32>
    %2 = tpu.matmul %0, %1, %cst {dimension_numbers = #tpu.dot_dimension_numbers<[1], [0], [0], [1], [0, 0, 1, 1], [], []>} : vector<64x64xbf16>, vector<64x128xbf16>, vector<64x128xf32> -> vector<64x128xf32>
    %c0_3 = arith.constant 0 : index
    %c0_4 = arith.constant 0 : index
    %3 = vector.load %arg3[%c0_3, %c0_4] : memref<64x128xf32, #tpu.memory_space<vmem>>, vector<64x128xf32>
    tpu.vector_store %arg3[%c0_3, %c0_4], %2 {strides = array<i32>} : memref<64x128xf32, #tpu.memory_space<vmem>>, vector<64x128xf32>,
    %4 = vector.shape_cast %2 : vector<64x128xf32> to vector<8x8x128xf32>
    %cst_5 = arith.constant dense<0.000000e+00> : vector<8x128xf32>
    %5 = vector.multi_reduction <add>, %4, %cst_5 [0] : vector<8x8x128xf32> to vector<8x128xf32>
    %c0_6 = arith.constant 0 : index
    %c0_7 = arith.constant 0 : index
    %6 = vector.load %arg4[%c0_6, %c0_7] : memref<8x128xf32, #tpu.memory_space<vmem>>, vector<8x128xf32>
    tpu.vector_store %arg4[%c0_6, %c0_7], %5 {strides = array<i32>} : memref<8x128xf32, #tpu.memory_space<vmem>>, vector<8x128xf32>,
    %7 = arith.mulf %4, %4 : vector<8x8x128xf32>
    %cst_8 = arith.constant dense<0.000000e+00> : vector<8x128xf32>
    %8 = vector.multi_reduction <add>, %7, %cst_8 [0] : vector<8x8x128xf32> to vector<8x128xf32>
    %c0_9 = arith.constant 0 : index
    %c0_10 = arith.constant 0 : index
    %9 = vector.load %arg5[%c0_9, %c0_10] : memref<8x128xf32, #tpu.memory_space<vmem>>, vector<8x128xf32>
    tpu.vector_store %arg5[%c0_9, %c0_10], %8 {strides = array<i32>} : memref<8x128xf32, #tpu.memory_space<vmem>>, vector<8x128xf32>,
    return
  }
  func.func @transform_0(%arg0: i32) -> (i32, i32) {
    %c0_i32 = arith.constant 0 : i32
    %c0_i32_0 = arith.constant 0 : i32
    return %arg0, %c0_i32 : i32, i32
  }
  func.func @transform_1(%arg0: i32) -> (i32, i32) {
    %c0_i32 = arith.constant 0 : i32
    %c0_i32_0 = arith.constant 0 : i32
    %c0_i32_1 = arith.constant 0 : i32
    return %c0_i32, %c0_i32_0 : i32, i32
  }
  func.func @transform_2(%arg0: i32) -> (i32, i32) {
    %c0_i32 = arith.constant 0 : i32
    %c0_i32_0 = arith.constant 0 : i32
    return %arg0, %c0_i32 : i32, i32
  }
  func.func @transform_3(%arg0: i32) -> (i32, i32) {
    %c0_i32 = arith.constant 0 : i32
    %c0_i32_0 = arith.constant 0 : i32
    return %arg0, %c0_i32 : i32, i32
  }
  func.func @transform_4(%arg0: i32) -> (i32, i32) {
    %c0_i32 = arith.constant 0 : i32
    %c0_i32_0 = arith.constant 0 : i32
    return %arg0, %c0_i32 : i32, i32
  }
}

module attributes {stable_mosaic.version = 11 : i64} {
  func.func @_norm_kernel(%arg0: i32, %arg1: memref<64x128xf32, #tpu.memory_space<vmem>>, %arg2: memref<1x128xf32, #tpu.memory_space<vmem>>, %arg3: memref<1x128xf32, #tpu.memory_space<vmem>>, %arg4: memref<64x128xf32, #tpu.memory_space<vmem>>) attributes {dimension_semantics = [#tpu.dimension_semantics<parallel>], iteration_bounds = array<i64: 2>, scalar_prefetch = 0 : i64, scratch_operands = 0 : i64, tpu.core_type = #tpu.core_type<tc>, window_params = [{transform_indices = @transform_0, window_bounds = array<i64: 64, 128>}, {pipeline_mode = #tpu.pipeline_mode<synchronous>, transform_indices = @transform_1, window_bounds = array<i64: 1, 128>}, {pipeline_mode = #tpu.pipeline_mode<synchronous>, transform_indices = @transform_2, window_bounds = array<i64: 1, 128>}, {transform_indices = @transform_3, window_bounds = array<i64: 64, 128>}]} {
    %c0 = arith.constant 0 : index
    %c0_0 = arith.constant 0 : index
    %0 = vector.load %arg1[%c0, %c0_0] : memref<64x128xf32, #tpu.memory_space<vmem>>, vector<64x128xf32>
    %c0_1 = arith.constant 0 : index
    %c0_2 = arith.constant 0 : index
    %1 = vector.load %arg2[%c0_1, %c0_2] : memref<1x128xf32, #tpu.memory_space<vmem>>, vector<1x128xf32>
    %2 = vector.broadcast %1 : vector<1x128xf32> to vector<64x128xf32>
    %3 = arith.mulf %0, %2 : vector<64x128xf32>
    %c0_3 = arith.constant 0 : index
    %c0_4 = arith.constant 0 : index
    %4 = vector.load %arg3[%c0_3, %c0_4] : memref<1x128xf32, #tpu.memory_space<vmem>>, vector<1x128xf32>
    %5 = vector.broadcast %4 : vector<1x128xf32> to vector<64x128xf32>
    %6 = arith.addf %3, %5 : vector<64x128xf32>
    %cst = arith.constant 0.000000e+00 : f32
    %7 = vector.broadcast %cst : f32 to vector<64x128xf32>
    %8 = arith.maximumf %6, %7 : vector<64x128xf32>
    %c0_5 = arith.constant 0 : index
    %c0_6 = arith.constant 0 : index
    %9 = vector.load %arg4[%c0_5, %c0_6] : memref<64x128xf32, #tpu.memory_space<vmem>>, vector<64x128xf32>
    tpu.vector_store %arg4[%c0_5, %c0_6], %8 {strides = array<i32>} : memref<64x128xf32, #tpu.memory_space<vmem>>, vector<64x128xf32>,
    return
  }
  func.func @transform_0(%arg0: i32) -> (i32, i32) {
    %c0_i32 = arith.constant 0 : i32
    %c0_i32_0 = arith.constant 0 : i32
    return %arg0, %c0_i32 : i32, i32
  }
  func.func @transform_1(%arg0: i32) -> (i32, i32) {
    %c0_i32 = arith.constant 0 : i32
    %c0_i32_0 = arith.constant 0 : i32
    %c0_i32_1 = arith.constant 0 : i32
    return %c0_i32, %c0_i32_0 : i32, i32
  }
  func.func @transform_2(%arg0: i32) -> (i32, i32) {
    %c0_i32 = arith.constant 0 : i32
    %c0_i32_0 = arith.constant 0 : i32
    %c0_i32_1 = arith.constant 0 : i32
    return %c0_i32, %c0_i32_0 : i32, i32
  }
  func.func @transform_3(%arg0: i32) -> (i32, i32) {
    %c0_i32 = arith.constant 0 : i32
    %c0_i32_0 = arith.constant 0 : i32
    return %arg0, %c0_i32 : i32, i32
  }
}

module attributes {stable_mosaic.version = 11 : i64} {
  func.func @_matmul_stats_kernel(%arg0: i32, %arg1: memref<64x36xbf16, #tpu.memory_space<vmem>>, %arg2: memref<36x128xbf16, #tpu.memory_space<vmem>>, %arg3: memref<64x128xf32, #tpu.memory_space<vmem>>, %arg4: memref<8x128xf32, #tpu.memory_space<vmem>>, %arg5: memref<8x128xf32, #tpu.memory_space<vmem>>) attributes {dimension_semantics = [#tpu.dimension_semantics<parallel>], iteration_bounds = array<i64: 2>, scalar_prefetch = 0 : i64, scratch_operands = 0 : i64, tpu.core_type = #tpu.core_type<tc>, window_params = [{transform_indices = @transform_0, window_bounds = array<i64: 64, 36>}, {pipeline_mode = #tpu.pipeline_mode<synchronous>, transform_indices = @transform_1, window_bounds = array<i64: 36, 128>}, {transform_indices = @transform_2, window_bounds = array<i64: 64, 128>}, {transform_indices = @transform_3, window_bounds = array<i64: 8, 128>}, {transform_indices = @transform_4, window_bounds = array<i64: 8, 128>}]} {
    %c0 = arith.constant 0 : index
    %c0_0 = arith.constant 0 : index
    %0 = vector.load %arg1[%c0, %c0_0] : memref<64x36xbf16, #tpu.memory_space<vmem>>, vector<64x36xbf16>
    %c0_1 = arith.constant 0 : index
    %c0_2 = arith.constant 0 : index
    %1 = vector.load %arg2[%c0_1, %c0_2] : memref<36x128xbf16, #tpu.memory_space<vmem>>, vector<36x128xbf16>
    %cst = arith.constant dense<0.000000e+00> : vector<64x128xf32>
    %2 = tpu.matmul %0, %1, %cst {dimension_numbers = #tpu.dot_dimension_numbers<[1], [0], [0], [1], [0, 0, 1, 1], [], []>} : vector<64x36xbf16>, vector<36x128xbf16>, vector<64x128xf32> -> vector<64x128xf32>
    %c0_3 = arith.constant 0 : index
    %c0_4 = arith.constant 0 : index
    %3 = vector.load %arg3[%c0_3, %c0_4] : memref<64x128xf32, #tpu.memory_space<vmem>>, vector<64x128xf32>
    tpu.vector_store %arg3[%c0_3, %c0_4], %2 {strides = array<i32>} : memref<64x128xf32, #tpu.memory_space<vmem>>, vector<64x128xf32>,
    %4 = vector.shape_cast %2 : vector<64x128xf32> to vector<8x8x128xf32>
    %cst_5 = arith.constant dense<0.000000e+00> : vector<8x128xf32>
    %5 = vector.multi_reduction <add>, %4, %cst_5 [0] : vector<8x8x128xf32> to vector<8x128xf32>
    %c0_6 = arith.constant 0 : index
    %c0_7 = arith.constant 0 : index
    %6 = vector.load %arg4[%c0_6, %c0_7] : memref<8x128xf32, #tpu.memory_space<vmem>>, vector<8x128xf32>
    tpu.vector_store %arg4[%c0_6, %c0_7], %5 {strides = array<i32>} : memref<8x128xf32, #tpu.memory_space<vmem>>, vector<8x128xf32>,
    %7 = arith.mulf %4, %4 : vector<8x8x128xf32>
    %cst_8 = arith.constant dense<0.000000e+00> : vector<8x128xf32>
    %8 = vector.multi_reduction <add>, %7, %cst_8 [0] : vector<8x8x128xf32> to vector<8x128xf32>
    %c0_9 = arith.constant 0 : index
    %c0_10 = arith.constant 0 : index
    %9 = vector.load %arg5[%c0_9, %c0_10] : memref<8x128xf32, #tpu.memory_space<vmem>>, vector<8x128xf32>
    tpu.vector_store %arg5[%c0_9, %c0_10], %8 {strides = array<i32>} : memref<8x128xf32, #tpu.memory_space<vmem>>, vector<8x128xf32>,
    return
  }
  func.func @transform_0(%arg0: i32) -> (i32, i32) {
    %c0_i32 = arith.constant 0 : i32
    %c0_i32_0 = arith.constant 0 : i32
    return %arg0, %c0_i32 : i32, i32
  }
  func.func @transform_1(%arg0: i32) -> (i32, i32) {
    %c0_i32 = arith.constant 0 : i32
    %c0_i32_0 = arith.constant 0 : i32
    %c0_i32_1 = arith.constant 0 : i32
    return %c0_i32, %c0_i32_0 : i32, i32
  }
  func.func @transform_2(%arg0: i32) -> (i32, i32) {
    %c0_i32 = arith.constant 0 : i32
    %c0_i32_0 = arith.constant 0 : i32
    return %arg0, %c0_i32 : i32, i32
  }
  func.func @transform_3(%arg0: i32) -> (i32, i32) {
    %c0_i32 = arith.constant 0 : i32
    %c0_i32_0 = arith.constant 0 : i32
    return %arg0, %c0_i32 : i32, i32
  }
  func.func @transform_4(%arg0: i32) -> (i32, i32) {
    %c0_i32 = arith.constant 0 : i32
    %c0_i32_0 = arith.constant 0 : i32
    return %arg0, %c0_i32 : i32, i32
  }
}

module attributes {stable_mosaic.version = 11 : i64} {
  func.func @_matmul_stats_kernel(%arg0: i32, %arg1: memref<64x72xbf16, #tpu.memory_space<vmem>>, %arg2: memref<72x128xbf16, #tpu.memory_space<vmem>>, %arg3: memref<64x128xf32, #tpu.memory_space<vmem>>, %arg4: memref<8x128xf32, #tpu.memory_space<vmem>>, %arg5: memref<8x128xf32, #tpu.memory_space<vmem>>) attributes {dimension_semantics = [#tpu.dimension_semantics<parallel>], iteration_bounds = array<i64: 2>, scalar_prefetch = 0 : i64, scratch_operands = 0 : i64, tpu.core_type = #tpu.core_type<tc>, window_params = [{transform_indices = @transform_0, window_bounds = array<i64: 64, 72>}, {pipeline_mode = #tpu.pipeline_mode<synchronous>, transform_indices = @transform_1, window_bounds = array<i64: 72, 128>}, {transform_indices = @transform_2, window_bounds = array<i64: 64, 128>}, {transform_indices = @transform_3, window_bounds = array<i64: 8, 128>}, {transform_indices = @transform_4, window_bounds = array<i64: 8, 128>}]} {
    %c0 = arith.constant 0 : index
    %c0_0 = arith.constant 0 : index
    %0 = vector.load %arg1[%c0, %c0_0] : memref<64x72xbf16, #tpu.memory_space<vmem>>, vector<64x72xbf16>
    %c0_1 = arith.constant 0 : index
    %c0_2 = arith.constant 0 : index
    %1 = vector.load %arg2[%c0_1, %c0_2] : memref<72x128xbf16, #tpu.memory_space<vmem>>, vector<72x128xbf16>
    %cst = arith.constant dense<0.000000e+00> : vector<64x128xf32>
    %2 = tpu.matmul %0, %1, %cst {dimension_numbers = #tpu.dot_dimension_numbers<[1], [0], [0], [1], [0, 0, 1, 1], [], []>} : vector<64x72xbf16>, vector<72x128xbf16>, vector<64x128xf32> -> vector<64x128xf32>
    %c0_3 = arith.constant 0 : index
    %c0_4 = arith.constant 0 : index
    %3 = vector.load %arg3[%c0_3, %c0_4] : memref<64x128xf32, #tpu.memory_space<vmem>>, vector<64x128xf32>
    tpu.vector_store %arg3[%c0_3, %c0_4], %2 {strides = array<i32>} : memref<64x128xf32, #tpu.memory_space<vmem>>, vector<64x128xf32>,
    %4 = vector.shape_cast %2 : vector<64x128xf32> to vector<8x8x128xf32>
    %cst_5 = arith.constant dense<0.000000e+00> : vector<8x128xf32>
    %5 = vector.multi_reduction <add>, %4, %cst_5 [0] : vector<8x8x128xf32> to vector<8x128xf32>
    %c0_6 = arith.constant 0 : index
    %c0_7 = arith.constant 0 : index
    %6 = vector.load %arg4[%c0_6, %c0_7] : memref<8x128xf32, #tpu.memory_space<vmem>>, vector<8x128xf32>
    tpu.vector_store %arg4[%c0_6, %c0_7], %5 {strides = array<i32>} : memref<8x128xf32, #tpu.memory_space<vmem>>, vector<8x128xf32>,
    %7 = arith.mulf %4, %4 : vector<8x8x128xf32>
    %cst_8 = arith.constant dense<0.000000e+00> : vector<8x128xf32>
    %8 = vector.multi_reduction <add>, %7, %cst_8 [0] : vector<8x8x128xf32> to vector<8x128xf32>
    %c0_9 = arith.constant 0 : index
    %c0_10 = arith.constant 0 : index
    %9 = vector.load %arg5[%c0_9, %c0_10] : memref<8x128xf32, #tpu.memory_space<vmem>>, vector<8x128xf32>
    tpu.vector_store %arg5[%c0_9, %c0_10], %8 {strides = array<i32>} : memref<8x128xf32, #tpu.memory_space<vmem>>, vector<8x128xf32>,
    return
  }
  func.func @transform_0(%arg0: i32) -> (i32, i32) {
    %c0_i32 = arith.constant 0 : i32
    %c0_i32_0 = arith.constant 0 : i32
    return %arg0, %c0_i32 : i32, i32
  }
  func.func @transform_1(%arg0: i32) -> (i32, i32) {
    %c0_i32 = arith.constant 0 : i32
    %c0_i32_0 = arith.constant 0 : i32
    %c0_i32_1 = arith.constant 0 : i32
    return %c0_i32, %c0_i32_0 : i32, i32
  }
  func.func @transform_2(%arg0: i32) -> (i32, i32) {
    %c0_i32 = arith.constant 0 : i32
    %c0_i32_0 = arith.constant 0 : i32
    return %arg0, %c0_i32 : i32, i32
  }
  func.func @transform_3(%arg0: i32) -> (i32, i32) {
    %c0_i32 = arith.constant 0 : i32
    %c0_i32_0 = arith.constant 0 : i32
    return %arg0, %c0_i32 : i32, i32
  }
  func.func @transform_4(%arg0: i32) -> (i32, i32) {
    %c0_i32 = arith.constant 0 : i32
    %c0_i32_0 = arith.constant 0 : i32
    return %arg0, %c0_i32 : i32, i32
  }
}

module attributes {stable_mosaic.version = 11 : i64} {
  func.func @_norm_kernel(%arg0: i32, %arg1: memref<64x128xf32, #tpu.memory_space<vmem>>, %arg2: memref<1x128xf32, #tpu.memory_space<vmem>>, %arg3: memref<1x128xf32, #tpu.memory_space<vmem>>, %arg4: memref<64x128xf32, #tpu.memory_space<vmem>>, %arg5: memref<64x128xf32, #tpu.memory_space<vmem>>) attributes {dimension_semantics = [#tpu.dimension_semantics<parallel>], iteration_bounds = array<i64: 2>, scalar_prefetch = 0 : i64, scratch_operands = 0 : i64, tpu.core_type = #tpu.core_type<tc>, window_params = [{transform_indices = @transform_0, window_bounds = array<i64: 64, 128>}, {pipeline_mode = #tpu.pipeline_mode<synchronous>, transform_indices = @transform_1, window_bounds = array<i64: 1, 128>}, {pipeline_mode = #tpu.pipeline_mode<synchronous>, transform_indices = @transform_2, window_bounds = array<i64: 1, 128>}, {transform_indices = @transform_3, window_bounds = array<i64: 64, 128>}, {transform_indices = @transform_4, window_bounds = array<i64: 64, 128>}]} {
    %c0 = arith.constant 0 : index
    %c0_0 = arith.constant 0 : index
    %0 = vector.load %arg1[%c0, %c0_0] : memref<64x128xf32, #tpu.memory_space<vmem>>, vector<64x128xf32>
    %c0_1 = arith.constant 0 : index
    %c0_2 = arith.constant 0 : index
    %1 = vector.load %arg2[%c0_1, %c0_2] : memref<1x128xf32, #tpu.memory_space<vmem>>, vector<1x128xf32>
    %2 = vector.broadcast %1 : vector<1x128xf32> to vector<64x128xf32>
    %3 = arith.mulf %0, %2 : vector<64x128xf32>
    %c0_3 = arith.constant 0 : index
    %c0_4 = arith.constant 0 : index
    %4 = vector.load %arg3[%c0_3, %c0_4] : memref<1x128xf32, #tpu.memory_space<vmem>>, vector<1x128xf32>
    %5 = vector.broadcast %4 : vector<1x128xf32> to vector<64x128xf32>
    %6 = arith.addf %3, %5 : vector<64x128xf32>
    %c0_5 = arith.constant 0 : index
    %c0_6 = arith.constant 0 : index
    %7 = vector.load %arg4[%c0_5, %c0_6] : memref<64x128xf32, #tpu.memory_space<vmem>>, vector<64x128xf32>
    %8 = arith.addf %6, %7 : vector<64x128xf32>
    %c0_7 = arith.constant 0 : index
    %c0_8 = arith.constant 0 : index
    %9 = vector.load %arg5[%c0_7, %c0_8] : memref<64x128xf32, #tpu.memory_space<vmem>>, vector<64x128xf32>
    tpu.vector_store %arg5[%c0_7, %c0_8], %8 {strides = array<i32>} : memref<64x128xf32, #tpu.memory_space<vmem>>, vector<64x128xf32>,
    return
  }
  func.func @transform_0(%arg0: i32) -> (i32, i32) {
    %c0_i32 = arith.constant 0 : i32
    %c0_i32_0 = arith.constant 0 : i32
    return %arg0, %c0_i32 : i32, i32
  }
  func.func @transform_1(%arg0: i32) -> (i32, i32) {
    %c0_i32 = arith.constant 0 : i32
    %c0_i32_0 = arith.constant 0 : i32
    %c0_i32_1 = arith.constant 0 : i32
    return %c0_i32, %c0_i32_0 : i32, i32
  }
  func.func @transform_2(%arg0: i32) -> (i32, i32) {
    %c0_i32 = arith.constant 0 : i32
    %c0_i32_0 = arith.constant 0 : i32
    %c0_i32_1 = arith.constant 0 : i32
    return %c0_i32, %c0_i32_0 : i32, i32
  }
  func.func @transform_3(%arg0: i32) -> (i32, i32) {
    %c0_i32 = arith.constant 0 : i32
    %c0_i32_0 = arith.constant 0 : i32
    return %arg0, %c0_i32 : i32, i32
  }
  func.func @transform_4(%arg0: i32) -> (i32, i32) {
    %c0_i32 = arith.constant 0 : i32
    %c0_i32_0 = arith.constant 0 : i32
    return %arg0, %c0_i32 : i32, i32
  }
}

</mosaic_0001>

<llo_original>
// kernel: down_conv_block_forward.7
$region0: #{down_conv_block_forward.7}
  #allocation0 [shape = 'u32[]', space=smem, size = 0x4, offset = 0x4, fixed_abs, tag = 'smem constant byte address 0x4 - core index']
  #allocation1 [shape = 'u32[72,128]{1,0:T(1,128)}', space=vmem, size = 0x9000, scoped, tag = 'internal scratch']
  %s0 = inlined_call_operand.vmem [shape: f32[128,128], index: 0, kind: input, shape index: {}]
  %s1 = inlined_call_operand.vmem [shape: f32[1,128], index: 1, kind: input, shape index: {}]
  %s2 = inlined_call_operand.vmem [shape: f32[1,128], index: 2, kind: input, shape index: {}]
  %s3 = inlined_call_operand.vmem [shape: f32[128,128], index: 3, kind: output, shape index: {}]
  %s4 = sld [smem:[#allocation0]]
  $region45: #{down_conv_block_forward.7} parent=0
    _
  %s6 = ssub.s32 1, %s4
  %s7 = scalar_select 0, %s6, %s4
  loop: start=0, step=1, limit=4
  $region2: #{down_conv_block_forward.7} parent=0 // loop_pre_header
    _
  $region3: #{down_conv_block_forward.7} parent=0 // loop_header
    %s9 = sphi 0, %s13
    %p10 = scmp.ge.s32.totalorder %s9, 4
    %s19 = sphi 0, %s21
    %s22 = sphi 0, %s19
    %s23 = sphi 0, %s22
    %s39 = sphi 0, %s23
    %s43 = sphi 0, %s43
    %s45 = sphi 0, %s43
    %s46 = sphi 0, %s45
    %s60 = sphi 0, %s46
    %s64 = sphi 0, %s64
    %s66 = sphi 0, %s64
    %s67 = sphi 0, %s66
    %s81 = sphi 0, %s67
    %s87 = sphi 0, %s89
    %s90 = sphi 0, %s87
    %s91 = sphi 0, %s90
    %s107 = sphi 0, %s91
  $region4: #{down_conv_block_forward.7} parent=0 // loop_header_branch
    %12 = sbr.rel (%p10) target = $region8
  $region5: #{down_conv_block_forward.7} parent=0 // loop_body
    %s14 = ssub.s32 %s9, 1
    %s15 = ssub.s32 %s9, 2
    %s16 = sadd.s32 %s9, 1
    %s17 = ssub.s32 %s9, %s16
    %p18 = scmp.eq.s32.totalorder %s17, 0
    %s20 = sadd.s32 %s19, 1
    %s21 = scalar_select %p18, %s19, %s20
    %p24 = pneg %p18
    %p25 = scmp.eq.s32.totalorder %s9, 1
    %p26 = por %p24, %p25
    %p27 = scmp.ne.s32.totalorder %s19, %s22
    %p28 = scmp.eq.s32.totalorder %s9, 0
    %p29 = por %p27, %p28
    %p30 = scmp.ne.s32.totalorder %s19, %s22
    %p31 = scmp.eq.s32.totalorder %s14, 1
    %p32 = por %p30, %p31
    %p33 = scmp.ne.s32.totalorder %s22, %s23
    %p34 = scmp.eq.s32.totalorder %s14, 0
    %p35 = por %p33, %p34
    %p36 = scmp.ne.s32.totalorder %s22, %s23
    %p37 = scmp.eq.s32.totalorder %s15, 1
    %p38 = por %p36, %p37
    %p40 = scmp.ne.s32.totalorder %s23, %s39
    %p41 = scmp.eq.s32.totalorder %s15, 0
    %p42 = por %p40, %p41
    %s44 = sadd.s32 %s43, 1
    %p47 = scmp.eq.s32.totalorder %s9, 1
    %p48 = scmp.ne.s32.totalorder %s43, %s45
    %p49 = scmp.eq.s32.totalorder %s9, 0
    %p50 = por %p48, %p49
    %p51 = scmp.ne.s32.totalorder %s43, %s45
    %p52 = scmp.eq.s32.totalorder %s14, 1
    %p53 = por %p51, %p52
    %p54 = scmp.ne.s32.totalorder %s45, %s46
    %p55 = scmp.eq.s32.totalorder %s14, 0
    %p56 = por %p54, %p55
    %p57 = scmp.ne.s32.totalorder %s45, %s46
    %p58 = scmp.eq.s32.totalorder %s15, 1
    %p59 = por %p57, %p58
    %p61 = scmp.ne.s32.totalorder %s46, %s60
    %p62 = scmp.eq.s32.totalorder %s15, 0
    %p63 = por %p61, %p62
    %s65 = sadd.s32 %s64, 1
    %p68 = scmp.eq.s32.totalorder %s9, 1
    %p69 = scmp.ne.s32.totalorder %s64, %s66
    %p70 = scmp.eq.s32.totalorder %s9, 0
    %p71 = por %p69, %p70
    %p72 = scmp.ne.s32.totalorder %s64, %s66
    %p73 = scmp.eq.s32.totalorder %s14, 1
    %p74 = por %p72, %p73
    %p75 = scmp.ne.s32.totalorder %s66, %s67
    %p76 = scmp.eq.s32.totalorder %s14, 0
    %p77 = por %p75, %p76
    %p78 = scmp.ne.s32.totalorder %s66, %s67
    %p79 = scmp.eq.s32.totalorder %s15, 1
    %p80 = por %p78, %p79
    %p82 = scmp.ne.s32.totalorder %s67, %s81
    %p83 = scmp.eq.s32.totalorder %s15, 0
    %p84 = por %p82, %p83
    %s85 = ssub.s32 %s9, %s16
    %p86 = scmp.eq.s32.totalorder %s85, 0
    %s88 = sadd.s32 %s87, 1
    %s89 = scalar_select %p86, %s87, %s88
    %p92 = pneg %p86
    %p93 = scmp.eq.s32.totalorder %s9, 1
    %p94 = por %p92, %p93
    %p95 = scmp.ne.s32.totalorder %s87, %s90
    %p96 = scmp.eq.s32.totalorder %s9, 0
    %p97 = por %p95, %p96
    %p98 = scmp.ne.s32.totalorder %s87, %s90
    %p99 = scmp.eq.s32.totalorder %s14, 1
    %p100 = por %p98, %p99
    %p101 = scmp.ne.s32.totalorder %s90, %s91
    %p102 = scmp.eq.s32.totalorder %s14, 0
    %p103 = por %p101, %p102
    %p104 = scmp.ne.s32.totalorder %s90, %s91
    %p105 = scmp.eq.s32.totalorder %s15, 1
    %p106 = por %p104, %p105
    %p108 = scmp.ne.s32.totalorder %s91, %s107
    %p109 = scmp.eq.s32.totalorder %s15, 0
    %p110 = por %p108, %p109
    %p111 = scmp.le.s32.totalorder 1, %s9
    %p112 = scmp.lt.s32.totalorder %s9, 3
    %p113 = pnand %p111, %p112
    %p114 = pneg %p113
    // Predicated region
    $region9: #{down_conv_block_forward.7} parent=5 // pred_check
      _
    $region10: #{down_conv_block_forward.7} parent=5 // pred_check_branch
      %116 = sbr.rel (%p113) target = $region12
    $region11: #{down_conv_block_forward.7} parent=5 // pred_region
      %s117 = ssub.s32 %s9, 1
      // Predicated region
      $region13: #{down_conv_block_forward.7} parent=11 // pred_check
        %p118 = pneg %p56
      $region14: #{down_conv_block_forward.7} parent=11 // pred_check_branch
        %120 = sbr.rel (%p118) target = $region16
      $region15: #{down_conv_block_forward.7} parent=11 // pred_region
        _
      $region16: #{down_conv_block_forward.7} parent=11 // pred_fallthru
        _
      // Predicated region
      $region17: #{down_conv_block_forward.7} parent=11 // pred_check
        %p121 = pneg %p77
      $region18: #{down_conv_block_forward.7} parent=11 // pred_check_branch
        %123 = sbr.rel (%p121) target = $region20
      $region19: #{down_conv_block_forward.7} parent=11 // pred_region
        _
      $region20: #{down_conv_block_forward.7} parent=11 // pred_fallthru
        _
    $region12: #{down_conv_block_forward.7} parent=5 // pred_fallthru
      _
    %p124 = scmp.lt.s32.totalorder %s9, 2
    // Predicated region
    $region21: #{down_conv_block_forward.7} parent=5 // pred_check
      %p125 = pneg %p124
    $region22: #{down_conv_block_forward.7} parent=5 // pred_check_branch
      %127 = sbr.rel (%p125) target = $region24
    $region23: #{down_conv_block_forward.7} parent=5 // pred_region
      // Predicated region
      $region25: #{down_conv_block_forward.7} parent=23 // pred_check
        %p128 = pneg %p29
      $region26: #{down_conv_block_forward.7} parent=23 // pred_check_branch
        %130 = sbr.rel (%p128) target = $region28
      $region27: #{down_conv_block_forward.7} parent=23 // pred_region
        %s131 = smul.u32 8, %s9
        %p132 = scmp.lt.s32.totalorder %s131, 15
        %s133 = scalar_select %p132, %s131, 15
        %s134 = smul.addr %s133, 8
        %s135 = scalar_lea.vmem %s0, %s134
        %s136 = smul.u32 8, %s9
      $region28: #{down_conv_block_forward.7} parent=23 // pred_fallthru
        _
    $region24: #{down_conv_block_forward.7} parent=5 // pred_fallthru
      _
    %p137 = scmp.le.s32.totalorder 1, %s9
    %p138 = scmp.lt.s32.totalorder %s9, 3
    %p139 = pnand %p137, %p138
    %p140 = pneg %p139
    // Predicated region
    $region29: #{down_conv_block_forward.7} parent=5 // pred_check
      _
    $region30: #{down_conv_block_forward.7} parent=5 // pred_check_branch
      %142 = sbr.rel (%p139) target = $region32
    $region31: #{down_conv_block_forward.7} parent=5 // pred_region
      %s143 = ssub.s32 %s9, 1
      %s144 = smul.u32 8, %s14
      %p145 = scmp.lt.s32.totalorder %s144, 15
      %s146 = scalar_select %p145, %s144, 15
      %s147 = smul.addr %s146, 8
      %s148 = scalar_lea.vmem %s0, %s147
      %p149 = pneg %p35
      %p150 = pneg %p32
      %p151 = pneg %p56
      %p152 = pneg %p53
      %p153 = pneg %p77
      %p154 = pneg %p74
      %p155 = pneg %p103
      %p156 = pneg %p100
      %s157 = smul.u32 8, %s14
      %p158 = scmp.lt.s32.totalorder %s157, 15
      %s159 = scalar_select %p158, %s157, 15
      %s160 = smul.addr %s159, 8
      %s161 = scalar_lea.vmem %s3, %s160
      %s162 = smul.u32 8, %s14
      %p163 = scmp.lt.s32.totalorder %s162, 15
      %s164 = scalar_select %p163, %s162, 15
      %s165 = smul.addr %s164, 8
      %s166 = scalar_lea.vmem %s0, %s165
      %s167 = smul.u32 8, %s14
      %s168 = smul.u32 8, %s14
      %p169 = scmp.lt.s32.totalorder %s168, 15
      %s170 = scalar_select %p169, %s168, 15
      %s171 = smul.addr %s170, 8
      %s172 = scalar_lea.vmem %s3, %s171
      %s173 = smul.u32 8, %s14
      %v174 = vld [vmem:[%s166] sm:$0xff]
      %v175 = vld [vmem:[%s166 + $0x8] sm:$0xff]
      %v176 = vld [vmem:[%s166 + $0x10] sm:$0xff]
      %v177 = vld [vmem:[%s166 + $0x18] sm:$0xff]
      %v178 = vld [vmem:[%s166 + $0x20] sm:$0xff]
      %v179 = vld [vmem:[%s166 + $0x28] sm:$0xff]
      %v180 = vld [vmem:[%s166 + $0x30] sm:$0xff]
      %v181 = vld [vmem:[%s166 + $0x38] sm:$0xff]
      %v182 = vld [vmem:[%s1] sm:$0x1]
      %v184 = vperm.slane %v182, 0
      %v186 = vmul.f32 %v174, %v184
      %v187 = vmul.f32 %v175, %v184
      %v188 = vmul.f32 %v176, %v184
      %v189 = vmul.f32 %v177, %v184
      %v190 = vmul.f32 %v178, %v184
      %v191 = vmul.f32 %v179, %v184
      %v192 = vmul.f32 %v180, %v184
      %v193 = vmul.f32 %v181, %v184
      %v194 = vld [vmem:[%s2] sm:$0x1]
      %v196 = vperm.slane %v194, 0
      %v198 = vadd.f32 %v186, %v196
      %v199 = vadd.f32 %v187, %v196
      %v200 = vadd.f32 %v188, %v196
      %v201 = vadd.f32 %v189, %v196
      %v202 = vadd.f32 %v190, %v196
      %v203 = vadd.f32 %v191, %v196
      %v204 = vadd.f32 %v192, %v196
      %v205 = vadd.f32 %v193, %v196
      %v206 = vmax.f32 %v198, 0.0
      %v207 = vmax.f32 %v199, 0.0
      %v208 = vmax.f32 %v200, 0.0
      %v209 = vmax.f32 %v201, 0.0
      %v210 = vmax.f32 %v202, 0.0
      %v211 = vmax.f32 %v203, 0.0
      %v212 = vmax.f32 %v204, 0.0
      %v213 = vmax.f32 %v205, 0.0
      %214 = vst [vmem:[%s172] sm:$0xff] %v206
      %215 = vst [vmem:[%s172 + $0x8] sm:$0xff] %v207
      %216 = vst [vmem:[%s172 + $0x10] sm:$0xff] %v208
      %217 = vst [vmem:[%s172 + $0x18] sm:$0xff] %v209
      %218 = vst [vmem:[%s172 + $0x20] sm:$0xff] %v210
      %219 = vst [vmem:[%s172 + $0x28] sm:$0xff] %v211
      %220 = vst [vmem:[%s172 + $0x30] sm:$0xff] %v212
      %221 = vst [vmem:[%s172 + $0x38] sm:$0xff] %v213
      %s222 = smul.u32 8, %s14
      %p223 = scmp.lt.s32.totalorder %s222, 15
      %s224 = scalar_select %p223, %s222, 15
      %s225 = smul.addr %s224, 8
      %s226 = scalar_lea.vmem %s3, %s225
      // Predicated region
      $region33: #{down_conv_block_forward.7} parent=31 // pred_check
        %p227 = pneg %p100
      $region34: #{down_conv_block_forward.7} parent=31 // pred_check_branch
        %229 = sbr.rel (%p227) target = $region36
      $region35: #{down_conv_block_forward.7} parent=31 // pred_region
        %s230 = smul.u32 8, %s14
      $region36: #{down_conv_block_forward.7} parent=31 // pred_fallthru
        _
    $region32: #{down_conv_block_forward.7} parent=5 // pred_fallthru
      _
    %p231 = scmp.le.s32.totalorder 2, %s9
    // Predicated region
    $region37: #{down_conv_block_forward.7} parent=5 // pred_check
      %p232 = pneg %p231
    $region38: #{down_conv_block_forward.7} parent=5 // pred_check_branch
      %234 = sbr.rel (%p232) target = $region40
    $region39: #{down_conv_block_forward.7} parent=5 // pred_region
      %s235 = ssub.s32 %s9, 2
      // Predicated region
      $region41: #{down_conv_block_forward.7} parent=39 // pred_check
        %p236 = pneg %p106
      $region42: #{down_conv_block_forward.7} parent=39 // pred_check_branch
        %238 = sbr.rel (%p236) target = $region44
      $region43: #{down_conv_block_forward.7} parent=39 // pred_region
        %s239 = smul.u32 8, %s15
        %p240 = scmp.lt.s32.totalorder %s239, 15
        %s241 = scalar_select %p240, %s239, 15
        %s242 = smul.addr %s241, 8
        %s243 = scalar_lea.vmem %s3, %s242
      $region44: #{down_conv_block_forward.7} parent=39 // pred_fallthru
        _
    $region40: #{down_conv_block_forward.7} parent=5 // pred_fallthru
      _
  $region6: #{down_conv_block_forward.7} parent=0 // loop_footer
    %s13 = sadd.s32 1, %s9
  $region7: #{down_conv_block_forward.7} parent=0 // loop_footer_branch
    %8 = sbr.rel target = $region3
  $region8: #{down_conv_block_forward.7} parent=0 // loop_exit
    _

// kernel: down_conv_block_forward.6
$region0: #{down_conv_block_forward.6}
  #allocation0 [shape = 'u32[]', space=smem, size = 0x4, offset = 0x4, fixed_abs, tag = 'smem constant byte address 0x4 - core index']
  #allocation1 [shape = 'u32[72,128]{1,0:T(1,128)}', space=vmem, size = 0x9000, scoped, tag = 'internal scratch']
  %s0 = inlined_call_operand.vmem [shape: bf16[128,64], index: 0, kind: input, shape index: {}]
  %s1 = inlined_call_operand.vmem [shape: bf16[64,128], index: 1, kind: input, shape index: {}]
  %s2 = inlined_call_operand.vmem [shape: f32[128,128], index: 2, kind: output, shape index: {0}]
  %s3 = inlined_call_operand.vmem [shape: f32[16,128], index: 3, kind: output, shape index: {1}]
  %s4 = inlined_call_operand.vmem [shape: f32[16,128], index: 4, kind: output, shape index: {2}]
  %5 = xla_tuple %s2, %s3, %s4
  %s6 = sld [smem:[#allocation0]]
  $region57: #{down_conv_block_forward.6} parent=0
    _
  %s8 = ssub.s32 1, %s6
  %s9 = scalar_select 0, %s8, %s6
  loop: start=0, step=1, limit=4
  $region2: #{down_conv_block_forward.6} parent=0 // loop_pre_header
    _
  $region3: #{down_conv_block_forward.6} parent=0 // loop_header
    %s11 = sphi 0, %s15
    %p12 = scmp.ge.s32.totalorder %s11, 4
    %s21 = sphi 0, %s23
    %s24 = sphi 0, %s21
    %s25 = sphi 0, %s24
    %s41 = sphi 0, %s25
    %s45 = sphi 0, %s45
    %s47 = sphi 0, %s45
    %s48 = sphi 0, %s47
    %s62 = sphi 0, %s48
    %s68 = sphi 0, %s70
    %s71 = sphi 0, %s68
    %s72 = sphi 0, %s71
    %s88 = sphi 0, %s72
    %s94 = sphi 0, %s96
    %s97 = sphi 0, %s94
    %s98 = sphi 0, %s97
    %s114 = sphi 0, %s98
    %s120 = sphi 0, %s122
    %s123 = sphi 0, %s120
    %s124 = sphi 0, %s123
    %s140 = sphi 0, %s124
  $region4: #{down_conv_block_forward.6} parent=0 // loop_header_branch
    %14 = sbr.rel (%p12) target = $region8
  $region5: #{down_conv_block_forward.6} parent=0 // loop_body
    %s16 = ssub.s32 %s11, 1
    %s17 = ssub.s32 %s11, 2
    %s18 = sadd.s32 %s11, 1
    %s19 = ssub.s32 %s11, %s18
    %p20 = scmp.eq.s32.totalorder %s19, 0
    %s22 = sadd.s32 %s21, 1
    %s23 = scalar_select %p20, %s21, %s22
    %p26 = pneg %p20
    %p27 = scmp.eq.s32.totalorder %s11, 1
    %p28 = por %p26, %p27
    %p29 = scmp.ne.s32.totalorder %s21, %s24
    %p30 = scmp.eq.s32.totalorder %s11, 0
    %p31 = por %p29, %p30
    %p32 = scmp.ne.s32.totalorder %s21, %s24
    %p33 = scmp.eq.s32.totalorder %s16, 1
    %p34 = por %p32, %p33
    %p35 = scmp.ne.s32.totalorder %s24, %s25
    %p36 = scmp.eq.s32.totalorder %s16, 0
    %p37 = por %p35, %p36
    %p38 = scmp.ne.s32.totalorder %s24, %s25
    %p39 = scmp.eq.s32.totalorder %s17, 1
    %p40 = por %p38, %p39
    %p42 = scmp.ne.s32.totalorder %s25, %s41
    %p43 = scmp.eq.s32.totalorder %s17, 0
    %p44 = por %p42, %p43
    %s46 = sadd.s32 %s45, 1
    %p49 = scmp.eq.s32.totalorder %s11, 1
    %p50 = scmp.ne.s32.totalorder %s45, %s47
    %p51 = scmp.eq.s32.totalorder %s11, 0
    %p52 = por %p50, %p51
    %p53 = scmp.ne.s32.totalorder %s45, %s47
    %p54 = scmp.eq.s32.totalorder %s16, 1
    %p55 = por %p53, %p54
    %p56 = scmp.ne.s32.totalorder %s47, %s48
    %p57 = scmp.eq.s32.totalorder %s16, 0
    %p58 = por %p56, %p57
    %p59 = scmp.ne.s32.totalorder %s47, %s48
    %p60 = scmp.eq.s32.totalorder %s17, 1
    %p61 = por %p59, %p60
    %p63 = scmp.ne.s32.totalorder %s48, %s62
    %p64 = scmp.eq.s32.totalorder %s17, 0
    %p65 = por %p63, %p64
    %s66 = ssub.s32 %s11, %s18
    %p67 = scmp.eq.s32.totalorder %s66, 0
    %s69 = sadd.s32 %s68, 1
    %s70 = scalar_select %p67, %s68, %s69
    %p73 = pneg %p67
    %p74 = scmp.eq.s32.totalorder %s11, 1
    %p75 = por %p73, %p74
    %p76 = scmp.ne.s32.totalorder %s68, %s71
    %p77 = scmp.eq.s32.totalorder %s11, 0
    %p78 = por %p76, %p77
    %p79 = scmp.ne.s32.totalorder %s68, %s71
    %p80 = scmp.eq.s32.totalorder %s16, 1
    %p81 = por %p79, %p80
    %p82 = scmp.ne.s32.totalorder %s71, %s72
    %p83 = scmp.eq.s32.totalorder %s16, 0
    %p84 = por %p82, %p83
    %p85 = scmp.ne.s32.totalorder %s71, %s72
    %p86 = scmp.eq.s32.totalorder %s17, 1
    %p87 = por %p85, %p86
    %p89 = scmp.ne.s32.totalorder %s72, %s88
    %p90 = scmp.eq.s32.totalorder %s17, 0
    %p91 = por %p89, %p90
    %s92 = ssub.s32 %s11, %s18
    %p93 = scmp.eq.s32.totalorder %s92, 0
    %s95 = sadd.s32 %s94, 1
    %s96 = scalar_select %p93, %s94, %s95
    %p99 = pneg %p93
    %p100 = scmp.eq.s32.totalorder %s11, 1
    %p101 = por %p99, %p100
    %p102 = scmp.ne.s32.totalorder %s94, %s97
    %p103 = scmp.eq.s32.totalorder %s11, 0
    %p104 = por %p102, %p103
    %p105 = scmp.ne.s32.totalorder %s94, %s97
    %p106 = scmp.eq.s32.totalorder %s16, 1
    %p107 = por %p105, %p106
    %p108 = scmp.ne.s32.totalorder %s97, %s98
    %p109 = scmp.eq.s32.totalorder %s16, 0
    %p110 = por %p108, %p109
    %p111 = scmp.ne.s32.totalorder %s97, %s98
    %p112 = scmp.eq.s32.totalorder %s17, 1
    %p113 = por %p111, %p112
    %p115 = scmp.ne.s32.totalorder %s98, %s114
    %p116 = scmp.eq.s32.totalorder %s17, 0
    %p117 = por %p115, %p116
    %s118 = ssub.s32 %s11, %s18
    %p119 = scmp.eq.s32.totalorder %s118, 0
    %s121 = sadd.s32 %s120, 1
    %s122 = scalar_select %p119, %s120, %s121
    %p125 = pneg %p119
    %p126 = scmp.eq.s32.totalorder %s11, 1
    %p127 = por %p125, %p126
    %p128 = scmp.ne.s32.totalorder %s120, %s123
    %p129 = scmp.eq.s32.totalorder %s11, 0
    %p130 = por %p128, %p129
    %p131 = scmp.ne.s32.totalorder %s120, %s123
    %p132 = scmp.eq.s32.totalorder %s16, 1
    %p133 = por %p131, %p132
    %p134 = scmp.ne.s32.totalorder %s123, %s124
    %p135 = scmp.eq.s32.totalorder %s16, 0
    %p136 = por %p134, %p135
    %p137 = scmp.ne.s32.totalorder %s123, %s124
    %p138 = scmp.eq.s32.totalorder %s17, 1
    %p139 = por %p137, %p138
    %p141 = scmp.ne.s32.totalorder %s124, %s140
    %p142 = scmp.eq.s32.totalorder %s17, 0
    %p143 = por %p141, %p142
    %p144 = scmp.le.s32.totalorder 1, %s11
    %p145 = scmp.lt.s32.totalorder %s11, 3
    %p146 = pnand %p144, %p145
    %p147 = pneg %p146
    // Predicated region
    $region9: #{down_conv_block_forward.6} parent=5 // pred_check
      _
    $region10: #{down_conv_block_forward.6} parent=5 // pred_check_branch
      %149 = sbr.rel (%p146) target = $region12
    $region11: #{down_conv_block_forward.6} parent=5 // pred_region
      %s150 = ssub.s32 %s11, 1
      // Predicated region
      $region13: #{down_conv_block_forward.6} parent=11 // pred_check
        %p151 = pneg %p58
      $region14: #{down_conv_block_forward.6} parent=11 // pred_check_branch
        %153 = sbr.rel (%p151) target = $region16
      $region15: #{down_conv_block_forward.6} parent=11 // pred_region
        _
      $region16: #{down_conv_block_forward.6} parent=11 // pred_fallthru
        _
    $region12: #{down_conv_block_forward.6} parent=5 // pred_fallthru
      _
    %p154 = scmp.lt.s32.totalorder %s11, 2
    // Predicated region
    $region17: #{down_conv_block_forward.6} parent=5 // pred_check
      %p155 = pneg %p154
    $region18: #{down_conv_block_forward.6} parent=5 // pred_check_branch
      %157 = sbr.rel (%p155) target = $region20
    $region19: #{down_conv_block_forward.6} parent=5 // pred_region
      // Predicated region
      $region21: #{down_conv_block_forward.6} parent=19 // pred_check
        %p158 = pneg %p31
      $region22: #{down_conv_block_forward.6} parent=19 // pred_check_branch
        %160 = sbr.rel (%p158) target = $region24
      $region23: #{down_conv_block_forward.6} parent=19 // pred_region
        %s161 = smul.u32 8, %s11
        %p162 = scmp.lt.s32.totalorder %s161, 15
        %s163 = scalar_select %p162, %s161, 15
        %s164 = smul.addr %s163, 4
        %s165 = scalar_lea.vmem %s0, %s164
        %s166 = smul.u32 8, %s11
      $region24: #{down_conv_block_forward.6} parent=19 // pred_fallthru
        _
    $region20: #{down_conv_block_forward.6} parent=5 // pred_fallthru
      _
    %p167 = scmp.le.s32.totalorder 1, %s11
    %p168 = scmp.lt.s32.totalorder %s11, 3
    %p169 = pnand %p167, %p168
    %p170 = pneg %p169
    // Predicated region
    $region25: #{down_conv_block_forward.6} parent=5 // pred_check
      _
    $region26: #{down_conv_block_forward.6} parent=5 // pred_check_branch
      %172 = sbr.rel (%p169) target = $region28
    $region27: #{down_conv_block_forward.6} parent=5 // pred_region
      %s173 = ssub.s32 %s11, 1
      %s174 = smul.u32 8, %s16
      %p175 = scmp.lt.s32.totalorder %s174, 15
      %s176 = scalar_select %p175, %s174, 15
      %s177 = smul.addr %s176, 4
      %s178 = scalar_lea.vmem %s0, %s177
      %p179 = pneg %p37
      %p180 = pneg %p34
      %p181 = pneg %p58
      %p182 = pneg %p55
      %p183 = pneg %p84
      %p184 = pneg %p81
      %s185 = smul.u32 8, %s16
      %p186 = scmp.lt.s32.totalorder %s185, 15
      %s187 = scalar_select %p186, %s185, 15
      %s188 = smul.addr %s187, 8
      %s189 = scalar_lea.vmem %s2, %s188
      %p190 = pneg %p110
      %p191 = pneg %p107
      %p192 = scmp.lt.s32.totalorder %s16, 1
      %s193 = scalar_select %p192, %s16, 1
      %s194 = smul.addr %s193, 8
      %s195 = scalar_lea.vmem %s3, %s194
      %p196 = pneg %p136
      %p197 = pneg %p133
      %p198 = scmp.lt.s32.totalorder %s16, 1
      %s199 = scalar_select %p198, %s16, 1
      %s200 = smul.addr %s199, 8
      %s201 = scalar_lea.vmem %s4, %s200
      %s202 = smul.u32 8, %s16
      %p203 = scmp.lt.s32.totalorder %s202, 15
      %s204 = scalar_select %p203, %s202, 15
      %s205 = smul.addr %s204, 4
      %s206 = scalar_lea.vmem %s0, %s205
      %s207 = smul.u32 8, %s16
      %s208 = smul.u32 8, %s16
      %p209 = scmp.lt.s32.totalorder %s208, 15
      %s210 = scalar_select %p209, %s208, 15
      %s211 = smul.addr %s210, 8
      %s212 = scalar_lea.vmem %s2, %s211
      %s213 = smul.u32 8, %s16
      %p214 = scmp.lt.s32.totalorder %s16, 1
      %s215 = scalar_select %p214, %s16, 1
      %s216 = smul.addr %s215, 8
      %s217 = scalar_lea.vmem %s3, %s216
      %p218 = scmp.lt.s32.totalorder %s16, 1
      %s219 = scalar_select %p218, %s16, 1
      %s220 = smul.addr %s219, 8
      %s221 = scalar_lea.vmem %s4, %s220
      %v223 = vld [vmem:[%s206] sm:$0xf]
      %v224 = vld [vmem:[%s206 + $0x4] sm:$0xf]
      %v225 = vld [vmem:[%s206 + $0x8] sm:$0xf]
      %v226 = vld [vmem:[%s206 + $0xc] sm:$0xf]
      %v227 = vld [vmem:[%s206 + $0x10] sm:$0xf]
      %v228 = vld [vmem:[%s206 + $0x14] sm:$0xf]
      %v229 = vld [vmem:[%s206 + $0x18] sm:$0xf]
      %v230 = vld [vmem:[%s206 + $0x1c] sm:$0xf]
      %v231 = vld [vmem:[%s1] sm:$0xf]
      %v232 = vld [vmem:[%s1 + $0x4] sm:$0xf]
      %v233 = vld [vmem:[%s1 + $0x8] sm:$0xf]
      %v234 = vld [vmem:[%s1 + $0xc] sm:$0xf]
      %v235 = vld [vmem:[%s1 + $0x10] sm:$0xf]
      %v236 = vld [vmem:[%s1 + $0x14] sm:$0xf]
      %v237 = vld [vmem:[%s1 + $0x18] sm:$0xf]
      %v238 = vld [vmem:[%s1 + $0x1c] sm:$0xf]
      %v247 = vunpack.c.l.b16 %v223
      %v248 = vunpack.c.l.b16 %v224
      %v249 = vunpack.c.l.b16 %v225
      %v250 = vunpack.c.l.b16 %v226
      %v251 = vunpack.c.l.b16 %v227
      %v252 = vunpack.c.l.b16 %v228
      %v253 = vunpack.c.l.b16 %v229
      %v254 = vunpack.c.l.b16 %v230
      %v255 = vpack.c.b16 %v248, %v247
      %v256 = vpack.c.b16 %v250, %v249
      %v257 = vpack.c.b16 %v252, %v251
      %v258 = vpack.c.b16 %v254, %v253
      %v267 = vunpack.c.l.b16 %v231
      %v268 = vunpack.c.l.b16 %v232
      %v269 = vunpack.c.l.b16 %v233
      %v270 = vunpack.c.l.b16 %v234
      %v271 = vunpack.c.l.b16 %v235
      %v272 = vunpack.c.l.b16 %v236
      %v273 = vunpack.c.l.b16 %v237
      %v274 = vunpack.c.l.b16 %v238
      %v275 = vpack.c.b16 %v268, %v267
      %v276 = vpack.c.b16 %v270, %v269
      %v277 = vpack.c.b16 %v272, %v271
      %v278 = vpack.c.b16 %v274, %v273
      %vm283 = vcmask 523264
      %v285 = vsel %vm283, %v255, 0
      %v288 = vsel %vm283, %v256, 0
      %v291 = vsel %vm283, %v257, 0
      %v294 = vsel %vm283, %v258, 0
      %296 = vmatpush.bf16.msra.mxu0 0
      %297 = vmatpush.bf16.msra.mxu0 0
      %298 = vmatpush.bf16.msra.mxu0 0
      %299 = vmatpush.bf16.msra.mxu0 0
      %300 = vmatpush.bf16.msra.mxu0 %v278
      %301 = vmatpush.bf16.msra.mxu0 %v277
      %302 = vmatpush.bf16.msra.mxu0 %v276
      %303 = vmatpush.bf16.msra.mxu0 %v275
      %304 = vmatmul.bf16.gmra.mxu0 %v285
      %v305 = vpop.f32.mrf.mxu0
      %v306 = vadd.f32 0.0, %v305
      %v307 = vpop.f32.mrf.mxu0
      %v308 = vadd.f32 0.0, %v307
      %309 = vmatmul.bf16.gmra.mxu0 %v288
      %v310 = vpop.f32.mrf.mxu0
      %v311 = vadd.f32 0.0, %v310
      %v312 = vpop.f32.mrf.mxu0
      %v313 = vadd.f32 0.0, %v312
      %314 = vmatmul.bf16.gmra.mxu0 %v291
      %v315 = vpop.f32.mrf.mxu0
      %v316 = vadd.f32 0.0, %v315
      %v317 = vpop.f32.mrf.mxu0
      %v318 = vadd.f32 0.0, %v317
      %319 = vmatmul.bf16.gmra.mxu0 %v294
      %v320 = vpop.f32.mrf.mxu0
      %v321 = vadd.f32 0.0, %v320
      %v322 = vpop.f32.mrf.mxu0
      %v323 = vadd.f32 0.0, %v322
      %324 = vdwg.mxu0
      %325 = vst [vmem:[%s212] sm:$0xff] %v306
      %326 = vst [vmem:[%s212 + $0x8] sm:$0xff] %v308
      %327 = vst [vmem:[%s212 + $0x10] sm:$0xff] %v311
      %328 = vst [vmem:[%s212 + $0x18] sm:$0xff] %v313
      %329 = vst [vmem:[%s212 + $0x20] sm:$0xff] %v316
      %330 = vst [vmem:[%s212 + $0x28] sm:$0xff] %v318
      %331 = vst [vmem:[%s212 + $0x30] sm:$0xff] %v321
      %332 = vst [vmem:[%s212 + $0x38] sm:$0xff] %v323
      %v333 = vadd.f32 %v306, %v308
      %v334 = vadd.f32 %v333, %v311
      %v335 = vadd.f32 %v334, %v313
      %v336 = vadd.f32 %v335, %v316
      %v337 = vadd.f32 %v336, %v318
      %v338 = vadd.f32 %v337, %v321
      %v339 = vadd.f32 %v338, %v323
      %340 = vst [vmem:[%s217] sm:$0xff] %v339
      %v341 = vmul.f32 %v306, %v306
      %v342 = vmul.f32 %v308, %v308
      %v343 = vmul.f32 %v311, %v311
      %v344 = vmul.f32 %v313, %v313
      %v345 = vmul.f32 %v316, %v316
      %v346 = vmul.f32 %v318, %v318
      %v347 = vmul.f32 %v321, %v321
      %v348 = vmul.f32 %v323, %v323
      %v349 = vadd.f32 %v341, %v342
      %v350 = vadd.f32 %v349, %v343
      %v351 = vadd.f32 %v350, %v344
      %v352 = vadd.f32 %v351, %v345
      %v353 = vadd.f32 %v352, %v346
      %v354 = vadd.f32 %v353, %v347
      %v355 = vadd.f32 %v354, %v348
      %356 = vst [vmem:[%s221] sm:$0xff] %v355
      %s357 = smul.u32 8, %s16
      %p358 = scmp.lt.s32.totalorder %s357, 15
      %s359 = scalar_select %p358, %s357, 15
      %s360 = smul.addr %s359, 8
      %s361 = scalar_lea.vmem %s2, %s360
      %p362 = scmp.lt.s32.totalorder %s16, 1
      %s363 = scalar_select %p362, %s16, 1
      %s364 = smul.addr %s363, 8
      %s365 = scalar_lea.vmem %s3, %s364
      %p366 = scmp.lt.s32.totalorder %s16, 1
      %s367 = scalar_select %p366, %s16, 1
      %s368 = smul.addr %s367, 8
      %s369 = scalar_lea.vmem %s4, %s368
      // Predicated region
      $region29: #{down_conv_block_forward.6} parent=27 // pred_check
        %p370 = pneg %p81
      $region30: #{down_conv_block_forward.6} parent=27 // pred_check_branch
        %372 = sbr.rel (%p370) target = $region32
      $region31: #{down_conv_block_forward.6} parent=27 // pred_region
        %s373 = smul.u32 8, %s16
      $region32: #{down_conv_block_forward.6} parent=27 // pred_fallthru
        _
      // Predicated region
      $region33: #{down_conv_block_forward.6} parent=27 // pred_check
        %p374 = pneg %p107
      $region34: #{down_conv_block_forward.6} parent=27 // pred_check_branch
        %376 = sbr.rel (%p374) target = $region36
      $region35: #{down_conv_block_forward.6} parent=27 // pred_region
        _
      $region36: #{down_conv_block_forward.6} parent=27 // pred_fallthru
        _
      // Predicated region
      $region37: #{down_conv_block_forward.6} parent=27 // pred_check
        %p377 = pneg %p133
      $region38: #{down_conv_block_forward.6} parent=27 // pred_check_branch
        %379 = sbr.rel (%p377) target = $region40
      $region39: #{down_conv_block_forward.6} parent=27 // pred_region
        _
      $region40: #{down_conv_block_forward.6} parent=27 // pred_fallthru
        _
    $region28: #{down_conv_block_forward.6} parent=5 // pred_fallthru
      _
    %p380 = scmp.le.s32.totalorder 2, %s11
    // Predicated region
    $region41: #{down_conv_block_forward.6} parent=5 // pred_check
      %p381 = pneg %p380
    $region42: #{down_conv_block_forward.6} parent=5 // pred_check_branch
      %383 = sbr.rel (%p381) target = $region44
    $region43: #{down_conv_block_forward.6} parent=5 // pred_region
      %s384 = ssub.s32 %s11, 2
      // Predicated region
      $region45: #{down_conv_block_forward.6} parent=43 // pred_check
        %p385 = pneg %p87
      $region46: #{down_conv_block_forward.6} parent=43 // pred_check_branch
        %387 = sbr.rel (%p385) target = $region48
      $region47: #{down_conv_block_forward.6} parent=43 // pred_region
        %s388 = smul.u32 8, %s17
        %p389 = scmp.lt.s32.totalorder %s388, 15
        %s390 = scalar_select %p389, %s388, 15
        %s391 = smul.addr %s390, 8
        %s392 = scalar_lea.vmem %s2, %s391
      $region48: #{down_conv_block_forward.6} parent=43 // pred_fallthru
        _
      // Predicated region
      $region49: #{down_conv_block_forward.6} parent=43 // pred_check
        %p393 = pneg %p113
      $region50: #{down_conv_block_forward.6} parent=43 // pred_check_branch
        %395 = sbr.rel (%p393) target = $region52
      $region51: #{down_conv_block_forward.6} parent=43 // pred_region
        %p396 = scmp.lt.s32.totalorder %s17, 1
        %s397 = scalar_select %p396, %s17, 1
        %s398 = smul.addr %s397, 8
        %s399 = scalar_lea.vmem %s3, %s398
      $region52: #{down_conv_block_forward.6} parent=43 // pred_fallthru
        _
      // Predicated region
      $region53: #{down_conv_block_forward.6} parent=43 // pred_check
        %p400 = pneg %p139
      $region54: #{down_conv_block_forward.6} parent=43 // pred_check_branch
        %402 = sbr.rel (%p400) target = $region56
      $region55: #{down_conv_block_forward.6} parent=43 // pred_region
        %p403 = scmp.lt.s32.totalorder %s17, 1
        %s404 = scalar_select %p403, %s17, 1
        %s405 = smul.addr %s404, 8
        %s406 = scalar_lea.vmem %s4, %s405
      $region56: #{down_conv_block_forward.6} parent=43 // pred_fallthru
        _
    $region44: #{down_conv_block_forward.6} parent=5 // pred_fallthru
      _
  $region6: #{down_conv_block_forward.6} parent=0 // loop_footer
    %s15 = sadd.s32 1, %s11
  $region7: #{down_conv_block_forward.6} parent=0 // loop_footer_branch
    %10 = sbr.rel target = $region3
  $region8: #{down_conv_block_forward.6} parent=0 // loop_exit
    _

// kernel: down_conv_block_forward.8
$region0: #{down_conv_block_forward.8}
  #allocation0 [shape = 'u32[]', space=smem, size = 0x4, offset = 0x4, fixed_abs, tag = 'smem constant byte address 0x4 - core index']
  #allocation1 [shape = 'u32[72,128]{1,0:T(1,128)}', space=vmem, size = 0x9000, scoped, tag = 'internal scratch']
  %s0 = inlined_call_operand.vmem [shape: bf16[128,36], index: 0, kind: input, shape index: {}]
  %s1 = inlined_call_operand.vmem [shape: bf16[36,128], index: 1, kind: input, shape index: {}]
  %s2 = inlined_call_operand.vmem [shape: f32[128,128], index: 2, kind: output, shape index: {0}]
  %s3 = inlined_call_operand.vmem [shape: f32[16,128], index: 3, kind: output, shape index: {1}]
  %s4 = inlined_call_operand.vmem [shape: f32[16,128], index: 4, kind: output, shape index: {2}]
  %5 = xla_tuple %s2, %s3, %s4
  %s6 = sld [smem:[#allocation0]]
  $region57: #{down_conv_block_forward.8} parent=0
    _
  %s8 = ssub.s32 1, %s6
  %s9 = scalar_select 0, %s8, %s6
  loop: start=0, step=1, limit=4
  $region2: #{down_conv_block_forward.8} parent=0 // loop_pre_header
    _
  $region3: #{down_conv_block_forward.8} parent=0 // loop_header
    %s11 = sphi 0, %s15
    %p12 = scmp.ge.s32.totalorder %s11, 4
    %s21 = sphi 0, %s23
    %s24 = sphi 0, %s21
    %s25 = sphi 0, %s24
    %s41 = sphi 0, %s25
    %s45 = sphi 0, %s45
    %s47 = sphi 0, %s45
    %s48 = sphi 0, %s47
    %s62 = sphi 0, %s48
    %s68 = sphi 0, %s70
    %s71 = sphi 0, %s68
    %s72 = sphi 0, %s71
    %s88 = sphi 0, %s72
    %s94 = sphi 0, %s96
    %s97 = sphi 0, %s94
    %s98 = sphi 0, %s97
    %s114 = sphi 0, %s98
    %s120 = sphi 0, %s122
    %s123 = sphi 0, %s120
    %s124 = sphi 0, %s123
    %s140 = sphi 0, %s124
  $region4: #{down_conv_block_forward.8} parent=0 // loop_header_branch
    %14 = sbr.rel (%p12) target = $region8
  $region5: #{down_conv_block_forward.8} parent=0 // loop_body
    %s16 = ssub.s32 %s11, 1
    %s17 = ssub.s32 %s11, 2
    %s18 = sadd.s32 %s11, 1
    %s19 = ssub.s32 %s11, %s18
    %p20 = scmp.eq.s32.totalorder %s19, 0
    %s22 = sadd.s32 %s21, 1
    %s23 = scalar_select %p20, %s21, %s22
    %p26 = pneg %p20
    %p27 = scmp.eq.s32.totalorder %s11, 1
    %p28 = por %p26, %p27
    %p29 = scmp.ne.s32.totalorder %s21, %s24
    %p30 = scmp.eq.s32.totalorder %s11, 0
    %p31 = por %p29, %p30
    %p32 = scmp.ne.s32.totalorder %s21, %s24
    %p33 = scmp.eq.s32.totalorder %s16, 1
    %p34 = por %p32, %p33
    %p35 = scmp.ne.s32.totalorder %s24, %s25
    %p36 = scmp.eq.s32.totalorder %s16, 0
    %p37 = por %p35, %p36
    %p38 = scmp.ne.s32.totalorder %s24, %s25
    %p39 = scmp.eq.s32.totalorder %s17, 1
    %p40 = por %p38, %p39
    %p42 = scmp.ne.s32.totalorder %s25, %s41
    %p43 = scmp.eq.s32.totalorder %s17, 0
    %p44 = por %p42, %p43
    %s46 = sadd.s32 %s45, 1
    %p49 = scmp.eq.s32.totalorder %s11, 1
    %p50 = scmp.ne.s32.totalorder %s45, %s47
    %p51 = scmp.eq.s32.totalorder %s11, 0
    %p52 = por %p50, %p51
    %p53 = scmp.ne.s32.totalorder %s45, %s47
    %p54 = scmp.eq.s32.totalorder %s16, 1
    %p55 = por %p53, %p54
    %p56 = scmp.ne.s32.totalorder %s47, %s48
    %p57 = scmp.eq.s32.totalorder %s16, 0
    %p58 = por %p56, %p57
    %p59 = scmp.ne.s32.totalorder %s47, %s48
    %p60 = scmp.eq.s32.totalorder %s17, 1
    %p61 = por %p59, %p60
    %p63 = scmp.ne.s32.totalorder %s48, %s62
    %p64 = scmp.eq.s32.totalorder %s17, 0
    %p65 = por %p63, %p64
    %s66 = ssub.s32 %s11, %s18
    %p67 = scmp.eq.s32.totalorder %s66, 0
    %s69 = sadd.s32 %s68, 1
    %s70 = scalar_select %p67, %s68, %s69
    %p73 = pneg %p67
    %p74 = scmp.eq.s32.totalorder %s11, 1
    %p75 = por %p73, %p74
    %p76 = scmp.ne.s32.totalorder %s68, %s71
    %p77 = scmp.eq.s32.totalorder %s11, 0
    %p78 = por %p76, %p77
    %p79 = scmp.ne.s32.totalorder %s68, %s71
    %p80 = scmp.eq.s32.totalorder %s16, 1
    %p81 = por %p79, %p80
    %p82 = scmp.ne.s32.totalorder %s71, %s72
    %p83 = scmp.eq.s32.totalorder %s16, 0
    %p84 = por %p82, %p83
    %p85 = scmp.ne.s32.totalorder %s71, %s72
    %p86 = scmp.eq.s32.totalorder %s17, 1
    %p87 = por %p85, %p86
    %p89 = scmp.ne.s32.totalorder %s72, %s88
    %p90 = scmp.eq.s32.totalorder %s17, 0
    %p91 = por %p89, %p90
    %s92 = ssub.s32 %s11, %s18
    %p93 = scmp.eq.s32.totalorder %s92, 0
    %s95 = sadd.s32 %s94, 1
    %s96 = scalar_select %p93, %s94, %s95
    %p99 = pneg %p93
    %p100 = scmp.eq.s32.totalorder %s11, 1
    %p101 = por %p99, %p100
    %p102 = scmp.ne.s32.totalorder %s94, %s97
    %p103 = scmp.eq.s32.totalorder %s11, 0
    %p104 = por %p102, %p103
    %p105 = scmp.ne.s32.totalorder %s94, %s97
    %p106 = scmp.eq.s32.totalorder %s16, 1
    %p107 = por %p105, %p106
    %p108 = scmp.ne.s32.totalorder %s97, %s98
    %p109 = scmp.eq.s32.totalorder %s16, 0
    %p110 = por %p108, %p109
    %p111 = scmp.ne.s32.totalorder %s97, %s98
    %p112 = scmp.eq.s32.totalorder %s17, 1
    %p113 = por %p111, %p112
    %p115 = scmp.ne.s32.totalorder %s98, %s114
    %p116 = scmp.eq.s32.totalorder %s17, 0
    %p117 = por %p115, %p116
    %s118 = ssub.s32 %s11, %s18
    %p119 = scmp.eq.s32.totalorder %s118, 0
    %s121 = sadd.s32 %s120, 1
    %s122 = scalar_select %p119, %s120, %s121
    %p125 = pneg %p119
    %p126 = scmp.eq.s32.totalorder %s11, 1
    %p127 = por %p125, %p126
    %p128 = scmp.ne.s32.totalorder %s120, %s123
    %p129 = scmp.eq.s32.totalorder %s11, 0
    %p130 = por %p128, %p129
    %p131 = scmp.ne.s32.totalorder %s120, %s123
    %p132 = scmp.eq.s32.totalorder %s16, 1
    %p133 = por %p131, %p132
    %p134 = scmp.ne.s32.totalorder %s123, %s124
    %p135 = scmp.eq.s32.totalorder %s16, 0
    %p136 = por %p134, %p135
    %p137 = scmp.ne.s32.totalorder %s123, %s124
    %p138 = scmp.eq.s32.totalorder %s17, 1
    %p139 = por %p137, %p138
    %p141 = scmp.ne.s32.totalorder %s124, %s140
    %p142 = scmp.eq.s32.totalorder %s17, 0
    %p143 = por %p141, %p142
    %p144 = scmp.le.s32.totalorder 1, %s11
    %p145 = scmp.lt.s32.totalorder %s11, 3
    %p146 = pnand %p144, %p145
    %p147 = pneg %p146
    // Predicated region
    $region9: #{down_conv_block_forward.8} parent=5 // pred_check
      _
    $region10: #{down_conv_block_forward.8} parent=5 // pred_check_branch
      %149 = sbr.rel (%p146) target = $region12
    $region11: #{down_conv_block_forward.8} parent=5 // pred_region
      %s150 = ssub.s32 %s11, 1
      // Predicated region
      $region13: #{down_conv_block_forward.8} parent=11 // pred_check
        %p151 = pneg %p58
      $region14: #{down_conv_block_forward.8} parent=11 // pred_check_branch
        %153 = sbr.rel (%p151) target = $region16
      $region15: #{down_conv_block_forward.8} parent=11 // pred_region
        _
      $region16: #{down_conv_block_forward.8} parent=11 // pred_fallthru
        _
    $region12: #{down_conv_block_forward.8} parent=5 // pred_fallthru
      _
    %p154 = scmp.lt.s32.totalorder %s11, 2
    // Predicated region
    $region17: #{down_conv_block_forward.8} parent=5 // pred_check
      %p155 = pneg %p154
    $region18: #{down_conv_block_forward.8} parent=5 // pred_check_branch
      %157 = sbr.rel (%p155) target = $region20
    $region19: #{down_conv_block_forward.8} parent=5 // pred_region
      // Predicated region
      $region21: #{down_conv_block_forward.8} parent=19 // pred_check
        %p158 = pneg %p31
      $region22: #{down_conv_block_forward.8} parent=19 // pred_check_branch
        %160 = sbr.rel (%p158) target = $region24
      $region23: #{down_conv_block_forward.8} parent=19 // pred_region
        %s161 = smul.u32 8, %s11
        %p162 = scmp.lt.s32.totalorder %s161, 15
        %s163 = scalar_select %p162, %s161, 15
        %s164 = smul.addr %s163, 4
        %s165 = scalar_lea.vmem %s0, %s164
        %s166 = smul.u32 8, %s11
      $region24: #{down_conv_block_forward.8} parent=19 // pred_fallthru
        _
    $region20: #{down_conv_block_forward.8} parent=5 // pred_fallthru
      _
    %p167 = scmp.le.s32.totalorder 1, %s11
    %p168 = scmp.lt.s32.totalorder %s11, 3
    %p169 = pnand %p167, %p168
    %p170 = pneg %p169
    // Predicated region
    $region25: #{down_conv_block_forward.8} parent=5 // pred_check
      _
    $region26: #{down_conv_block_forward.8} parent=5 // pred_check_branch
      %172 = sbr.rel (%p169) target = $region28
    $region27: #{down_conv_block_forward.8} parent=5 // pred_region
      %s173 = ssub.s32 %s11, 1
      %s174 = smul.u32 8, %s16
      %p175 = scmp.lt.s32.totalorder %s174, 15
      %s176 = scalar_select %p175, %s174, 15
      %s177 = smul.addr %s176, 4
      %s178 = scalar_lea.vmem %s0, %s177
      %p179 = pneg %p37
      %p180 = pneg %p34
      %p181 = pneg %p58
      %p182 = pneg %p55
      %p183 = pneg %p84
      %p184 = pneg %p81
      %s185 = smul.u32 8, %s16
      %p186 = scmp.lt.s32.totalorder %s185, 15
      %s187 = scalar_select %p186, %s185, 15
      %s188 = smul.addr %s187, 8
      %s189 = scalar_lea.vmem %s2, %s188
      %p190 = pneg %p110
      %p191 = pneg %p107
      %p192 = scmp.lt.s32.totalorder %s16, 1
      %s193 = scalar_select %p192, %s16, 1
      %s194 = smul.addr %s193, 8
      %s195 = scalar_lea.vmem %s3, %s194
      %p196 = pneg %p136
      %p197 = pneg %p133
      %p198 = scmp.lt.s32.totalorder %s16, 1
      %s199 = scalar_select %p198, %s16, 1
      %s200 = smul.addr %s199, 8
      %s201 = scalar_lea.vmem %s4, %s200
      %s202 = smul.u32 8, %s16
      %p203 = scmp.lt.s32.totalorder %s202, 15
      %s204 = scalar_select %p203, %s202, 15
      %s205 = smul.addr %s204, 4
      %s206 = scalar_lea.vmem %s0, %s205
      %s207 = smul.u32 8, %s16
      %s208 = smul.u32 8, %s16
      %p209 = scmp.lt.s32.totalorder %s208, 15
      %s210 = scalar_select %p209, %s208, 15
      %s211 = smul.addr %s210, 8
      %s212 = scalar_lea.vmem %s2, %s211
      %s213 = smul.u32 8, %s16
      %p214 = scmp.lt.s32.totalorder %s16, 1
      %s215 = scalar_select %p214, %s16, 1
      %s216 = smul.addr %s215, 8
      %s217 = scalar_lea.vmem %s3, %s216
      %p218 = scmp.lt.s32.totalorder %s16, 1
      %s219 = scalar_select %p218, %s16, 1
      %s220 = smul.addr %s219, 8
      %s221 = scalar_lea.vmem %s4, %s220
      %v223 = vld [vmem:[%s206] sm:$0xf]
      %v224 = vld [vmem:[%s206 + $0x4] sm:$0xf]
      %v225 = vld [vmem:[%s206 + $0x8] sm:$0xf]
      %v226 = vld [vmem:[%s206 + $0xc] sm:$0xf]
      %v227 = vld [vmem:[%s206 + $0x10] sm:$0xf]
      %v228 = vld [vmem:[%s206 + $0x14] sm:$0xf]
      %v229 = vld [vmem:[%s206 + $0x18] sm:$0xf]
      %v230 = vld [vmem:[%s206 + $0x1c] sm:$0xf]
      %v231 = vld [vmem:[%s1] sm:$0xf]
      %v232 = vld [vmem:[%s1 + $0x4] sm:$0xf]
      %v233 = vld [vmem:[%s1 + $0x8] sm:$0xf]
      %v234 = vld [vmem:[%s1 + $0xc] sm:$0xf]
      %v235 = vld [vmem:[%s1 + $0x10] sm:$0x3]
      %v244 = vunpack.c.l.b16 %v223
      %v245 = vunpack.c.l.b16 %v224
      %v246 = vunpack.c.l.b16 %v225
      %v247 = vunpack.c.l.b16 %v226
      %v248 = vunpack.c.l.b16 %v227
      %v249 = vunpack.c.l.b16 %v228
      %v250 = vunpack.c.l.b16 %v229
      %v251 = vunpack.c.l.b16 %v230
      %v252 = vpack.c.b16 %v245, %v244
      %v253 = vpack.c.b16 %v247, %v246
      %v254 = vpack.c.b16 %v249, %v248
      %v255 = vpack.c.b16 %v251, %v250
      %v261 = vunpack.c.l.b16 %v231
      %v262 = vunpack.c.l.b16 %v232
      %v263 = vunpack.c.l.b16 %v233
      %v264 = vunpack.c.l.b16 %v234
      %v265 = vunpack.c.l.b16 %v235
      %v266 = vpack.c.b16 %v262, %v261
      %v267 = vpack.c.b16 %v264, %v263
      %v268 = vpack.c.b16 %v265, %v265
      %vm271 = vcmask 293888
      %v273 = vsel %vm271, %v252, 0
      %v276 = vsel %vm271, %v253, 0
      %v279 = vsel %vm271, %v254, 0
      %v282 = vsel %vm271, %v255, 0
      %vm284 = vcmask 1041408
      %v286 = vsel %vm284, %v268, 0
      %288 = vmatpush.bf16.msra.mxu0 0
      %289 = vmatpush.bf16.msra.mxu0 0
      %290 = vmatpush.bf16.msra.mxu0 0
      %291 = vmatpush.bf16.msra.mxu0 0
      %292 = vmatpush.bf16.msra.mxu0 0
      %293 = vmatpush.bf16.msra.mxu0 %v286
      %294 = vmatpush.bf16.msra.mxu0 %v267
      %295 = vmatpush.bf16.msra.mxu0 %v266
      %296 = vmatmul.bf16.gmra.mxu0 %v273
      %v297 = vpop.f32.mrf.mxu0
      %v298 = vadd.f32 0.0, %v297
      %v299 = vpop.f32.mrf.mxu0
      %v300 = vadd.f32 0.0, %v299
      %301 = vmatmul.bf16.gmra.mxu0 %v276
      %v302 = vpop.f32.mrf.mxu0
      %v303 = vadd.f32 0.0, %v302
      %v304 = vpop.f32.mrf.mxu0
      %v305 = vadd.f32 0.0, %v304
      %306 = vmatmul.bf16.gmra.mxu0 %v279
      %v307 = vpop.f32.mrf.mxu0
      %v308 = vadd.f32 0.0, %v307
      %v309 = vpop.f32.mrf.mxu0
      %v310 = vadd.f32 0.0, %v309
      %311 = vmatmul.bf16.gmra.mxu0 %v282
      %v312 = vpop.f32.mrf.mxu0
      %v313 = vadd.f32 0.0, %v312
      %v314 = vpop.f32.mrf.mxu0
      %v315 = vadd.f32 0.0, %v314
      %316 = vdwg.mxu0
      %317 = vst [vmem:[%s212] sm:$0xff] %v298
      %318 = vst [vmem:[%s212 + $0x8] sm:$0xff] %v300
      %319 = vst [vmem:[%s212 + $0x10] sm:$0xff] %v303
      %320 = vst [vmem:[%s212 + $0x18] sm:$0xff] %v305
      %321 = vst [vmem:[%s212 + $0x20] sm:$0xff] %v308
      %322 = vst [vmem:[%s212 + $0x28] sm:$0xff] %v310
      %323 = vst [vmem:[%s212 + $0x30] sm:$0xff] %v313
      %324 = vst [vmem:[%s212 + $0x38] sm:$0xff] %v315
      %v325 = vadd.f32 %v298, %v300
      %v326 = vadd.f32 %v325, %v303
      %v327 = vadd.f32 %v326, %v305
      %v328 = vadd.f32 %v327, %v308
      %v329 = vadd.f32 %v328, %v310
      %v330 = vadd.f32 %v329, %v313
      %v331 = vadd.f32 %v330, %v315
      %332 = vst [vmem:[%s217] sm:$0xff] %v331
      %v333 = vmul.f32 %v298, %v298
      %v334 = vmul.f32 %v300, %v300
      %v335 = vmul.f32 %v303, %v303
      %v336 = vmul.f32 %v305, %v305
      %v337 = vmul.f32 %v308, %v308
      %v338 = vmul.f32 %v310, %v310
      %v339 = vmul.f32 %v313, %v313
      %v340 = vmul.f32 %v315, %v315
      %v341 = vadd.f32 %v333, %v334
      %v342 = vadd.f32 %v341, %v335
      %v343 = vadd.f32 %v342, %v336
      %v344 = vadd.f32 %v343, %v337
      %v345 = vadd.f32 %v344, %v338
      %v346 = vadd.f32 %v345, %v339
      %v347 = vadd.f32 %v346, %v340
      %348 = vst [vmem:[%s221] sm:$0xff] %v347
      %s349 = smul.u32 8, %s16
      %p350 = scmp.lt.s32.totalorder %s349, 15
      %s351 = scalar_select %p350, %s349, 15
      %s352 = smul.addr %s351, 8
      %s353 = scalar_lea.vmem %s2, %s352
      %p354 = scmp.lt.s32.totalorder %s16, 1
      %s355 = scalar_select %p354, %s16, 1
      %s356 = smul.addr %s355, 8
      %s357 = scalar_lea.vmem %s3, %s356
      %p358 = scmp.lt.s32.totalorder %s16, 1
      %s359 = scalar_select %p358, %s16, 1
      %s360 = smul.addr %s359, 8
      %s361 = scalar_lea.vmem %s4, %s360
      // Predicated region
      $region29: #{down_conv_block_forward.8} parent=27 // pred_check
        %p362 = pneg %p81
      $region30: #{down_conv_block_forward.8} parent=27 // pred_check_branch
        %364 = sbr.rel (%p362) target = $region32
      $region31: #{down_conv_block_forward.8} parent=27 // pred_region
        %s365 = smul.u32 8, %s16
      $region32: #{down_conv_block_forward.8} parent=27 // pred_fallthru
        _
      // Predicated region
      $region33: #{down_conv_block_forward.8} parent=27 // pred_check
        %p366 = pneg %p107
      $region34: #{down_conv_block_forward.8} parent=27 // pred_check_branch
        %368 = sbr.rel (%p366) target = $region36
      $region35: #{down_conv_block_forward.8} parent=27 // pred_region
        _
      $region36: #{down_conv_block_forward.8} parent=27 // pred_fallthru
        _
      // Predicated region
      $region37: #{down_conv_block_forward.8} parent=27 // pred_check
        %p369 = pneg %p133
      $region38: #{down_conv_block_forward.8} parent=27 // pred_check_branch
        %371 = sbr.rel (%p369) target = $region40
      $region39: #{down_conv_block_forward.8} parent=27 // pred_region
        _
      $region40: #{down_conv_block_forward.8} parent=27 // pred_fallthru
        _
    $region28: #{down_conv_block_forward.8} parent=5 // pred_fallthru
      _
    %p372 = scmp.le.s32.totalorder 2, %s11
    // Predicated region
    $region41: #{down_conv_block_forward.8} parent=5 // pred_check
      %p373 = pneg %p372
    $region42: #{down_conv_block_forward.8} parent=5 // pred_check_branch
      %375 = sbr.rel (%p373) target = $region44
    $region43: #{down_conv_block_forward.8} parent=5 // pred_region
      %s376 = ssub.s32 %s11, 2
      // Predicated region
      $region45: #{down_conv_block_forward.8} parent=43 // pred_check
        %p377 = pneg %p87
      $region46: #{down_conv_block_forward.8} parent=43 // pred_check_branch
        %379 = sbr.rel (%p377) target = $region48
      $region47: #{down_conv_block_forward.8} parent=43 // pred_region
        %s380 = smul.u32 8, %s17
        %p381 = scmp.lt.s32.totalorder %s380, 15
        %s382 = scalar_select %p381, %s380, 15
        %s383 = smul.addr %s382, 8
        %s384 = scalar_lea.vmem %s2, %s383
      $region48: #{down_conv_block_forward.8} parent=43 // pred_fallthru
        _
      // Predicated region
      $region49: #{down_conv_block_forward.8} parent=43 // pred_check
        %p385 = pneg %p113
      $region50: #{down_conv_block_forward.8} parent=43 // pred_check_branch
        %387 = sbr.rel (%p385) target = $region52
      $region51: #{down_conv_block_forward.8} parent=43 // pred_region
        %p388 = scmp.lt.s32.totalorder %s17, 1
        %s389 = scalar_select %p388, %s17, 1
        %s390 = smul.addr %s389, 8
        %s391 = scalar_lea.vmem %s3, %s390
      $region52: #{down_conv_block_forward.8} parent=43 // pred_fallthru
        _
      // Predicated region
      $region53: #{down_conv_block_forward.8} parent=43 // pred_check
        %p392 = pneg %p139
      $region54: #{down_conv_block_forward.8} parent=43 // pred_check_branch
        %394 = sbr.rel (%p392) target = $region56
      $region55: #{down_conv_block_forward.8} parent=43 // pred_region
        %p395 = scmp.lt.s32.totalorder %s17, 1
        %s396 = scalar_select %p395, %s17, 1
        %s397 = smul.addr %s396, 8
        %s398 = scalar_lea.vmem %s4, %s397
      $region56: #{down_conv_block_forward.8} parent=43 // pred_fallthru
        _
    $region44: #{down_conv_block_forward.8} parent=5 // pred_fallthru
      _
  $region6: #{down_conv_block_forward.8} parent=0 // loop_footer
    %s15 = sadd.s32 1, %s11
  $region7: #{down_conv_block_forward.8} parent=0 // loop_footer_branch
    %10 = sbr.rel target = $region3
  $region8: #{down_conv_block_forward.8} parent=0 // loop_exit
    _

// kernel: down_conv_block_forward.10
$region0: #{down_conv_block_forward.10}
  #allocation0 [shape = 'u32[]', space=smem, size = 0x4, offset = 0x4, fixed_abs, tag = 'smem constant byte address 0x4 - core index']
  #allocation1 [shape = 'u32[72,128]{1,0:T(1,128)}', space=vmem, size = 0x9000, scoped, tag = 'internal scratch']
  %s0 = inlined_call_operand.vmem [shape: bf16[128,72], index: 0, kind: input, shape index: {}]
  %s1 = inlined_call_operand.vmem [shape: bf16[72,128], index: 1, kind: input, shape index: {}]
  %s2 = inlined_call_operand.vmem [shape: f32[128,128], index: 2, kind: output, shape index: {0}]
  %s3 = inlined_call_operand.vmem [shape: f32[16,128], index: 3, kind: output, shape index: {1}]
  %s4 = inlined_call_operand.vmem [shape: f32[16,128], index: 4, kind: output, shape index: {2}]
  %5 = xla_tuple %s2, %s3, %s4
  %s6 = sld [smem:[#allocation0]]
  $region57: #{down_conv_block_forward.10} parent=0
    _
  %s8 = ssub.s32 1, %s6
  %s9 = scalar_select 0, %s8, %s6
  loop: start=0, step=1, limit=4
  $region2: #{down_conv_block_forward.10} parent=0 // loop_pre_header
    _
  $region3: #{down_conv_block_forward.10} parent=0 // loop_header
    %s11 = sphi 0, %s15
    %p12 = scmp.ge.s32.totalorder %s11, 4
    %s21 = sphi 0, %s23
    %s24 = sphi 0, %s21
    %s25 = sphi 0, %s24
    %s41 = sphi 0, %s25
    %s45 = sphi 0, %s45
    %s47 = sphi 0, %s45
    %s48 = sphi 0, %s47
    %s62 = sphi 0, %s48
    %s68 = sphi 0, %s70
    %s71 = sphi 0, %s68
    %s72 = sphi 0, %s71
    %s88 = sphi 0, %s72
    %s94 = sphi 0, %s96
    %s97 = sphi 0, %s94
    %s98 = sphi 0, %s97
    %s114 = sphi 0, %s98
    %s120 = sphi 0, %s122
    %s123 = sphi 0, %s120
    %s124 = sphi 0, %s123
    %s140 = sphi 0, %s124
  $region4: #{down_conv_block_forward.10} parent=0 // loop_header_branch
    %14 = sbr.rel (%p12) target = $region8
  $region5: #{down_conv_block_forward.10} parent=0 // loop_body
    %s16 = ssub.s32 %s11, 1
    %s17 = ssub.s32 %s11, 2
    %s18 = sadd.s32 %s11, 1
    %s19 = ssub.s32 %s11, %s18
    %p20 = scmp.eq.s32.totalorder %s19, 0
    %s22 = sadd.s32 %s21, 1
    %s23 = scalar_select %p20, %s21, %s22
    %p26 = pneg %p20
    %p27 = scmp.eq.s32.totalorder %s11, 1
    %p28 = por %p26, %p27
    %p29 = scmp.ne.s32.totalorder %s21, %s24
    %p30 = scmp.eq.s32.totalorder %s11, 0
    %p31 = por %p29, %p30
    %p32 = scmp.ne.s32.totalorder %s21, %s24
    %p33 = scmp.eq.s32.totalorder %s16, 1
    %p34 = por %p32, %p33
    %p35 = scmp.ne.s32.totalorder %s24, %s25
    %p36 = scmp.eq.s32.totalorder %s16, 0
    %p37 = por %p35, %p36
    %p38 = scmp.ne.s32.totalorder %s24, %s25
    %p39 = scmp.eq.s32.totalorder %s17, 1
    %p40 = por %p38, %p39
    %p42 = scmp.ne.s32.totalorder %s25, %s41
    %p43 = scmp.eq.s32.totalorder %s17, 0
    %p44 = por %p42, %p43
    %s46 = sadd.s32 %s45, 1
    %p49 = scmp.eq.s32.totalorder %s11, 1
    %p50 = scmp.ne.s32.totalorder %s45, %s47
    %p51 = scmp.eq.s32.totalorder %s11, 0
    %p52 = por %p50, %p51
    %p53 = scmp.ne.s32.totalorder %s45, %s47
    %p54 = scmp.eq.s32.totalorder %s16, 1
    %p55 = por %p53, %p54
    %p56 = scmp.ne.s32.totalorder %s47, %s48
    %p57 = scmp.eq.s32.totalorder %s16, 0
    %p58 = por %p56, %p57
    %p59 = scmp.ne.s32.totalorder %s47, %s48
    %p60 = scmp.eq.s32.totalorder %s17, 1
    %p61 = por %p59, %p60
    %p63 = scmp.ne.s32.totalorder %s48, %s62
    %p64 = scmp.eq.s32.totalorder %s17, 0
    %p65 = por %p63, %p64
    %s66 = ssub.s32 %s11, %s18
    %p67 = scmp.eq.s32.totalorder %s66, 0
    %s69 = sadd.s32 %s68, 1
    %s70 = scalar_select %p67, %s68, %s69
    %p73 = pneg %p67
    %p74 = scmp.eq.s32.totalorder %s11, 1
    %p75 = por %p73, %p74
    %p76 = scmp.ne.s32.totalorder %s68, %s71
    %p77 = scmp.eq.s32.totalorder %s11, 0
    %p78 = por %p76, %p77
    %p79 = scmp.ne.s32.totalorder %s68, %s71
    %p80 = scmp.eq.s32.totalorder %s16, 1
    %p81 = por %p79, %p80
    %p82 = scmp.ne.s32.totalorder %s71, %s72
    %p83 = scmp.eq.s32.totalorder %s16, 0
    %p84 = por %p82, %p83
    %p85 = scmp.ne.s32.totalorder %s71, %s72
    %p86 = scmp.eq.s32.totalorder %s17, 1
    %p87 = por %p85, %p86
    %p89 = scmp.ne.s32.totalorder %s72, %s88
    %p90 = scmp.eq.s32.totalorder %s17, 0
    %p91 = por %p89, %p90
    %s92 = ssub.s32 %s11, %s18
    %p93 = scmp.eq.s32.totalorder %s92, 0
    %s95 = sadd.s32 %s94, 1
    %s96 = scalar_select %p93, %s94, %s95
    %p99 = pneg %p93
    %p100 = scmp.eq.s32.totalorder %s11, 1
    %p101 = por %p99, %p100
    %p102 = scmp.ne.s32.totalorder %s94, %s97
    %p103 = scmp.eq.s32.totalorder %s11, 0
    %p104 = por %p102, %p103
    %p105 = scmp.ne.s32.totalorder %s94, %s97
    %p106 = scmp.eq.s32.totalorder %s16, 1
    %p107 = por %p105, %p106
    %p108 = scmp.ne.s32.totalorder %s97, %s98
    %p109 = scmp.eq.s32.totalorder %s16, 0
    %p110 = por %p108, %p109
    %p111 = scmp.ne.s32.totalorder %s97, %s98
    %p112 = scmp.eq.s32.totalorder %s17, 1
    %p113 = por %p111, %p112
    %p115 = scmp.ne.s32.totalorder %s98, %s114
    %p116 = scmp.eq.s32.totalorder %s17, 0
    %p117 = por %p115, %p116
    %s118 = ssub.s32 %s11, %s18
    %p119 = scmp.eq.s32.totalorder %s118, 0
    %s121 = sadd.s32 %s120, 1
    %s122 = scalar_select %p119, %s120, %s121
    %p125 = pneg %p119
    %p126 = scmp.eq.s32.totalorder %s11, 1
    %p127 = por %p125, %p126
    %p128 = scmp.ne.s32.totalorder %s120, %s123
    %p129 = scmp.eq.s32.totalorder %s11, 0
    %p130 = por %p128, %p129
    %p131 = scmp.ne.s32.totalorder %s120, %s123
    %p132 = scmp.eq.s32.totalorder %s16, 1
    %p133 = por %p131, %p132
    %p134 = scmp.ne.s32.totalorder %s123, %s124
    %p135 = scmp.eq.s32.totalorder %s16, 0
    %p136 = por %p134, %p135
    %p137 = scmp.ne.s32.totalorder %s123, %s124
    %p138 = scmp.eq.s32.totalorder %s17, 1
    %p139 = por %p137, %p138
    %p141 = scmp.ne.s32.totalorder %s124, %s140
    %p142 = scmp.eq.s32.totalorder %s17, 0
    %p143 = por %p141, %p142
    %p144 = scmp.le.s32.totalorder 1, %s11
    %p145 = scmp.lt.s32.totalorder %s11, 3
    %p146 = pnand %p144, %p145
    %p147 = pneg %p146
    // Predicated region
    $region9: #{down_conv_block_forward.10} parent=5 // pred_check
      _
    $region10: #{down_conv_block_forward.10} parent=5 // pred_check_branch
      %149 = sbr.rel (%p146) target = $region12
    $region11: #{down_conv_block_forward.10} parent=5 // pred_region
      %s150 = ssub.s32 %s11, 1
      // Predicated region
      $region13: #{down_conv_block_forward.10} parent=11 // pred_check
        %p151 = pneg %p58
      $region14: #{down_conv_block_forward.10} parent=11 // pred_check_branch
        %153 = sbr.rel (%p151) target = $region16
      $region15: #{down_conv_block_forward.10} parent=11 // pred_region
        _
      $region16: #{down_conv_block_forward.10} parent=11 // pred_fallthru
        _
    $region12: #{down_conv_block_forward.10} parent=5 // pred_fallthru
      _
    %p154 = scmp.lt.s32.totalorder %s11, 2
    // Predicated region
    $region17: #{down_conv_block_forward.10} parent=5 // pred_check
      %p155 = pneg %p154
    $region18: #{down_conv_block_forward.10} parent=5 // pred_check_branch
      %157 = sbr.rel (%p155) target = $region20
    $region19: #{down_conv_block_forward.10} parent=5 // pred_region
      // Predicated region
      $region21: #{down_conv_block_forward.10} parent=19 // pred_check
        %p158 = pneg %p31
      $region22: #{down_conv_block_forward.10} parent=19 // pred_check_branch
        %160 = sbr.rel (%p158) target = $region24
      $region23: #{down_conv_block_forward.10} parent=19 // pred_region
        %s161 = smul.u32 8, %s11
        %p162 = scmp.lt.s32.totalorder %s161, 15
        %s163 = scalar_select %p162, %s161, 15
        %s164 = smul.addr %s163, 4
        %s165 = scalar_lea.vmem %s0, %s164
        %s166 = smul.u32 8, %s11
      $region24: #{down_conv_block_forward.10} parent=19 // pred_fallthru
        _
    $region20: #{down_conv_block_forward.10} parent=5 // pred_fallthru
      _
    %p167 = scmp.le.s32.totalorder 1, %s11
    %p168 = scmp.lt.s32.totalorder %s11, 3
    %p169 = pnand %p167, %p168
    %p170 = pneg %p169
    // Predicated region
    $region25: #{down_conv_block_forward.10} parent=5 // pred_check
      _
    $region26: #{down_conv_block_forward.10} parent=5 // pred_check_branch
      %172 = sbr.rel (%p169) target = $region28
    $region27: #{down_conv_block_forward.10} parent=5 // pred_region
      %s173 = ssub.s32 %s11, 1
      %s174 = smul.u32 8, %s16
      %p175 = scmp.lt.s32.totalorder %s174, 15
      %s176 = scalar_select %p175, %s174, 15
      %s177 = smul.addr %s176, 4
      %s178 = scalar_lea.vmem %s0, %s177
      %p179 = pneg %p37
      %p180 = pneg %p34
      %p181 = pneg %p58
      %p182 = pneg %p55
      %p183 = pneg %p84
      %p184 = pneg %p81
      %s185 = smul.u32 8, %s16
      %p186 = scmp.lt.s32.totalorder %s185, 15
      %s187 = scalar_select %p186, %s185, 15
      %s188 = smul.addr %s187, 8
      %s189 = scalar_lea.vmem %s2, %s188
      %p190 = pneg %p110
      %p191 = pneg %p107
      %p192 = scmp.lt.s32.totalorder %s16, 1
      %s193 = scalar_select %p192, %s16, 1
      %s194 = smul.addr %s193, 8
      %s195 = scalar_lea.vmem %s3, %s194
      %p196 = pneg %p136
      %p197 = pneg %p133
      %p198 = scmp.lt.s32.totalorder %s16, 1
      %s199 = scalar_select %p198, %s16, 1
      %s200 = smul.addr %s199, 8
      %s201 = scalar_lea.vmem %s4, %s200
      %s202 = smul.u32 8, %s16
      %p203 = scmp.lt.s32.totalorder %s202, 15
      %s204 = scalar_select %p203, %s202, 15
      %s205 = smul.addr %s204, 4
      %s206 = scalar_lea.vmem %s0, %s205
      %s207 = smul.u32 8, %s16
      %s208 = smul.u32 8, %s16
      %p209 = scmp.lt.s32.totalorder %s208, 15
      %s210 = scalar_select %p209, %s208, 15
      %s211 = smul.addr %s210, 8
      %s212 = scalar_lea.vmem %s2, %s211
      %s213 = smul.u32 8, %s16
      %p214 = scmp.lt.s32.totalorder %s16, 1
      %s215 = scalar_select %p214, %s16, 1
      %s216 = smul.addr %s215, 8
      %s217 = scalar_lea.vmem %s3, %s216
      %p218 = scmp.lt.s32.totalorder %s16, 1
      %s219 = scalar_select %p218, %s16, 1
      %s220 = smul.addr %s219, 8
      %s221 = scalar_lea.vmem %s4, %s220
      %v223 = vld [vmem:[%s206] sm:$0xf]
      %v224 = vld [vmem:[%s206 + $0x4] sm:$0xf]
      %v225 = vld [vmem:[%s206 + $0x8] sm:$0xf]
      %v226 = vld [vmem:[%s206 + $0xc] sm:$0xf]
      %v227 = vld [vmem:[%s206 + $0x10] sm:$0xf]
      %v228 = vld [vmem:[%s206 + $0x14] sm:$0xf]
      %v229 = vld [vmem:[%s206 + $0x18] sm:$0xf]
      %v230 = vld [vmem:[%s206 + $0x1c] sm:$0xf]
      %v231 = vld [vmem:[%s1] sm:$0xf]
      %v232 = vld [vmem:[%s1 + $0x4] sm:$0xf]
      %v233 = vld [vmem:[%s1 + $0x8] sm:$0xf]
      %v234 = vld [vmem:[%s1 + $0xc] sm:$0xf]
      %v235 = vld [vmem:[%s1 + $0x10] sm:$0xf]
      %v236 = vld [vmem:[%s1 + $0x14] sm:$0xf]
      %v237 = vld [vmem:[%s1 + $0x18] sm:$0xf]
      %v238 = vld [vmem:[%s1 + $0x1c] sm:$0xf]
      %v239 = vld [vmem:[%s1 + $0x20] sm:$0xf]
      %v248 = vunpack.c.l.b16 %v223
      %v249 = vunpack.c.l.b16 %v224
      %v250 = vunpack.c.l.b16 %v225
      %v251 = vunpack.c.l.b16 %v226
      %v252 = vunpack.c.l.b16 %v227
      %v253 = vunpack.c.l.b16 %v228
      %v254 = vunpack.c.l.b16 %v229
      %v255 = vunpack.c.l.b16 %v230
      %v256 = vpack.c.b16 %v249, %v248
      %v257 = vpack.c.b16 %v251, %v250
      %v258 = vpack.c.b16 %v253, %v252
      %v259 = vpack.c.b16 %v255, %v254
      %v269 = vunpack.c.l.b16 %v231
      %v270 = vunpack.c.l.b16 %v232
      %v271 = vunpack.c.l.b16 %v233
      %v272 = vunpack.c.l.b16 %v234
      %v273 = vunpack.c.l.b16 %v235
      %v274 = vunpack.c.l.b16 %v236
      %v275 = vunpack.c.l.b16 %v237
      %v276 = vunpack.c.l.b16 %v238
      %v277 = vunpack.c.l.b16 %v239
      %v278 = vpack.c.b16 %v270, %v269
      %v279 = vpack.c.b16 %v272, %v271
      %v280 = vpack.c.b16 %v274, %v273
      %v281 = vpack.c.b16 %v276, %v275
      %v282 = vpack.c.b16 %v277, %v277
      %vm287 = vcmask 588800
      %v289 = vsel %vm287, %v256, 0
      %v292 = vsel %vm287, %v257, 0
      %v295 = vsel %vm287, %v258, 0
      %v298 = vsel %vm287, %v259, 0
      %vm300 = vcmask 1043456
      %v302 = vsel %vm300, %v282, 0
      %304 = vmatpush.bf16.msra.mxu0 0
      %305 = vmatpush.bf16.msra.mxu0 0
      %306 = vmatpush.bf16.msra.mxu0 0
      %307 = vmatpush.bf16.msra.mxu0 %v302
      %308 = vmatpush.bf16.msra.mxu0 %v281
      %309 = vmatpush.bf16.msra.mxu0 %v280
      %310 = vmatpush.bf16.msra.mxu0 %v279
      %311 = vmatpush.bf16.msra.mxu0 %v278
      %312 = vmatmul.bf16.gmra.mxu0 %v289
      %v313 = vpop.f32.mrf.mxu0
      %v314 = vadd.f32 0.0, %v313
      %v315 = vpop.f32.mrf.mxu0
      %v316 = vadd.f32 0.0, %v315
      %317 = vmatmul.bf16.gmra.mxu0 %v292
      %v318 = vpop.f32.mrf.mxu0
      %v319 = vadd.f32 0.0, %v318
      %v320 = vpop.f32.mrf.mxu0
      %v321 = vadd.f32 0.0, %v320
      %322 = vmatmul.bf16.gmra.mxu0 %v295
      %v323 = vpop.f32.mrf.mxu0
      %v324 = vadd.f32 0.0, %v323
      %v325 = vpop.f32.mrf.mxu0
      %v326 = vadd.f32 0.0, %v325
      %327 = vmatmul.bf16.gmra.mxu0 %v298
      %v328 = vpop.f32.mrf.mxu0
      %v329 = vadd.f32 0.0, %v328
      %v330 = vpop.f32.mrf.mxu0
      %v331 = vadd.f32 0.0, %v330
      %332 = vdwg.mxu0
      %333 = vst [vmem:[%s212] sm:$0xff] %v314
      %334 = vst [vmem:[%s212 + $0x8] sm:$0xff] %v316
      %335 = vst [vmem:[%s212 + $0x10] sm:$0xff] %v319
      %336 = vst [vmem:[%s212 + $0x18] sm:$0xff] %v321
      %337 = vst [vmem:[%s212 + $0x20] sm:$0xff] %v324
      %338 = vst [vmem:[%s212 + $0x28] sm:$0xff] %v326
      %339 = vst [vmem:[%s212 + $0x30] sm:$0xff] %v329
      %340 = vst [vmem:[%s212 + $0x38] sm:$0xff] %v331
      %v341 = vadd.f32 %v314, %v316
      %v342 = vadd.f32 %v341, %v319
      %v343 = vadd.f32 %v342, %v321
      %v344 = vadd.f32 %v343, %v324
      %v345 = vadd.f32 %v344, %v326
      %v346 = vadd.f32 %v345, %v329
      %v347 = vadd.f32 %v346, %v331
      %348 = vst [vmem:[%s217] sm:$0xff] %v347
      %v349 = vmul.f32 %v314, %v314
      %v350 = vmul.f32 %v316, %v316
      %v351 = vmul.f32 %v319, %v319
      %v352 = vmul.f32 %v321, %v321
      %v353 = vmul.f32 %v324, %v324
      %v354 = vmul.f32 %v326, %v326
      %v355 = vmul.f32 %v329, %v329
      %v356 = vmul.f32 %v331, %v331
      %v357 = vadd.f32 %v349, %v350
      %v358 = vadd.f32 %v357, %v351
      %v359 = vadd.f32 %v358, %v352
      %v360 = vadd.f32 %v359, %v353
      %v361 = vadd.f32 %v360, %v354
      %v362 = vadd.f32 %v361, %v355
      %v363 = vadd.f32 %v362, %v356
      %364 = vst [vmem:[%s221] sm:$0xff] %v363
      %s365 = smul.u32 8, %s16
      %p366 = scmp.lt.s32.totalorder %s365, 15
      %s367 = scalar_select %p366, %s365, 15
      %s368 = smul.addr %s367, 8
      %s369 = scalar_lea.vmem %s2, %s368
      %p370 = scmp.lt.s32.totalorder %s16, 1
      %s371 = scalar_select %p370, %s16, 1
      %s372 = smul.addr %s371, 8
      %s373 = scalar_lea.vmem %s3, %s372
      %p374 = scmp.lt.s32.totalorder %s16, 1
      %s375 = scalar_select %p374, %s16, 1
      %s376 = smul.addr %s375, 8
      %s377 = scalar_lea.vmem %s4, %s376
      // Predicated region
      $region29: #{down_conv_block_forward.10} parent=27 // pred_check
        %p378 = pneg %p81
      $region30: #{down_conv_block_forward.10} parent=27 // pred_check_branch
        %380 = sbr.rel (%p378) target = $region32
      $region31: #{down_conv_block_forward.10} parent=27 // pred_region
        %s381 = smul.u32 8, %s16
      $region32: #{down_conv_block_forward.10} parent=27 // pred_fallthru
        _
      // Predicated region
      $region33: #{down_conv_block_forward.10} parent=27 // pred_check
        %p382 = pneg %p107
      $region34: #{down_conv_block_forward.10} parent=27 // pred_check_branch
        %384 = sbr.rel (%p382) target = $region36
      $region35: #{down_conv_block_forward.10} parent=27 // pred_region
        _
      $region36: #{down_conv_block_forward.10} parent=27 // pred_fallthru
        _
      // Predicated region
      $region37: #{down_conv_block_forward.10} parent=27 // pred_check
        %p385 = pneg %p133
      $region38: #{down_conv_block_forward.10} parent=27 // pred_check_branch
        %387 = sbr.rel (%p385) target = $region40
      $region39: #{down_conv_block_forward.10} parent=27 // pred_region
        _
      $region40: #{down_conv_block_forward.10} parent=27 // pred_fallthru
        _
    $region28: #{down_conv_block_forward.10} parent=5 // pred_fallthru
      _
    %p388 = scmp.le.s32.totalorder 2, %s11
    // Predicated region
    $region41: #{down_conv_block_forward.10} parent=5 // pred_check
      %p389 = pneg %p388
    $region42: #{down_conv_block_forward.10} parent=5 // pred_check_branch
      %391 = sbr.rel (%p389) target = $region44
    $region43: #{down_conv_block_forward.10} parent=5 // pred_region
      %s392 = ssub.s32 %s11, 2
      // Predicated region
      $region45: #{down_conv_block_forward.10} parent=43 // pred_check
        %p393 = pneg %p87
      $region46: #{down_conv_block_forward.10} parent=43 // pred_check_branch
        %395 = sbr.rel (%p393) target = $region48
      $region47: #{down_conv_block_forward.10} parent=43 // pred_region
        %s396 = smul.u32 8, %s17
        %p397 = scmp.lt.s32.totalorder %s396, 15
        %s398 = scalar_select %p397, %s396, 15
        %s399 = smul.addr %s398, 8
        %s400 = scalar_lea.vmem %s2, %s399
      $region48: #{down_conv_block_forward.10} parent=43 // pred_fallthru
        _
      // Predicated region
      $region49: #{down_conv_block_forward.10} parent=43 // pred_check
        %p401 = pneg %p113
      $region50: #{down_conv_block_forward.10} parent=43 // pred_check_branch
        %403 = sbr.rel (%p401) target = $region52
      $region51: #{down_conv_block_forward.10} parent=43 // pred_region
        %p404 = scmp.lt.s32.totalorder %s17, 1
        %s405 = scalar_select %p404, %s17, 1
        %s406 = smul.addr %s405, 8
        %s407 = scalar_lea.vmem %s3, %s406
      $region52: #{down_conv_block_forward.10} parent=43 // pred_fallthru
        _
      // Predicated region
      $region53: #{down_conv_block_forward.10} parent=43 // pred_check
        %p408 = pneg %p139
      $region54: #{down_conv_block_forward.10} parent=43 // pred_check_branch
        %410 = sbr.rel (%p408) target = $region56
      $region55: #{down_conv_block_forward.10} parent=43 // pred_region
        %p411 = scmp.lt.s32.totalorder %s17, 1
        %s412 = scalar_select %p411, %s17, 1
        %s413 = smul.addr %s412, 8
        %s414 = scalar_lea.vmem %s4, %s413
      $region56: #{down_conv_block_forward.10} parent=43 // pred_fallthru
        _
    $region44: #{down_conv_block_forward.10} parent=5 // pred_fallthru
      _
  $region6: #{down_conv_block_forward.10} parent=0 // loop_footer
    %s15 = sadd.s32 1, %s11
  $region7: #{down_conv_block_forward.10} parent=0 // loop_footer_branch
    %10 = sbr.rel target = $region3
  $region8: #{down_conv_block_forward.10} parent=0 // loop_exit
    _

// kernel: down_conv_block_forward.11
$region0: #{down_conv_block_forward.11}
  #allocation0 [shape = 'u32[]', space=smem, size = 0x4, offset = 0x4, fixed_abs, tag = 'smem constant byte address 0x4 - core index']
  #allocation1 [shape = 'u32[72,128]{1,0:T(1,128)}', space=vmem, size = 0x9000, scoped, tag = 'internal scratch']
  %s0 = inlined_call_operand.vmem [shape: f32[128,128], index: 0, kind: input, shape index: {}]
  %s1 = inlined_call_operand.vmem [shape: f32[1,128], index: 1, kind: input, shape index: {}]
  %s2 = inlined_call_operand.vmem [shape: f32[1,128], index: 2, kind: input, shape index: {}]
  %s3 = inlined_call_operand.vmem [shape: f32[128,128], index: 3, kind: input, shape index: {}]
  %s4 = inlined_call_operand.vmem [shape: f32[128,128], index: 4, kind: output, shape index: {}]
  %s5 = sld [smem:[#allocation0]]
  $region49: #{down_conv_block_forward.11} parent=0
    _
  %s7 = ssub.s32 1, %s5
  %s8 = scalar_select 0, %s7, %s5
  loop: start=0, step=1, limit=4
  $region2: #{down_conv_block_forward.11} parent=0 // loop_pre_header
    _
  $region3: #{down_conv_block_forward.11} parent=0 // loop_header
    %s10 = sphi 0, %s14
    %p11 = scmp.ge.s32.totalorder %s10, 4
    %s20 = sphi 0, %s22
    %s23 = sphi 0, %s20
    %s24 = sphi 0, %s23
    %s40 = sphi 0, %s24
    %s44 = sphi 0, %s44
    %s46 = sphi 0, %s44
    %s47 = sphi 0, %s46
    %s61 = sphi 0, %s47
    %s65 = sphi 0, %s65
    %s67 = sphi 0, %s65
    %s68 = sphi 0, %s67
    %s82 = sphi 0, %s68
    %s88 = sphi 0, %s90
    %s91 = sphi 0, %s88
    %s92 = sphi 0, %s91
    %s108 = sphi 0, %s92
    %s114 = sphi 0, %s116
    %s117 = sphi 0, %s114
    %s118 = sphi 0, %s117
    %s134 = sphi 0, %s118
  $region4: #{down_conv_block_forward.11} parent=0 // loop_header_branch
    %13 = sbr.rel (%p11) target = $region8
  $region5: #{down_conv_block_forward.11} parent=0 // loop_body
    %s15 = ssub.s32 %s10, 1
    %s16 = ssub.s32 %s10, 2
    %s17 = sadd.s32 %s10, 1
    %s18 = ssub.s32 %s10, %s17
    %p19 = scmp.eq.s32.totalorder %s18, 0
    %s21 = sadd.s32 %s20, 1
    %s22 = scalar_select %p19, %s20, %s21
    %p25 = pneg %p19
    %p26 = scmp.eq.s32.totalorder %s10, 1
    %p27 = por %p25, %p26
    %p28 = scmp.ne.s32.totalorder %s20, %s23
    %p29 = scmp.eq.s32.totalorder %s10, 0
    %p30 = por %p28, %p29
    %p31 = scmp.ne.s32.totalorder %s20, %s23
    %p32 = scmp.eq.s32.totalorder %s15, 1
    %p33 = por %p31, %p32
    %p34 = scmp.ne.s32.totalorder %s23, %s24
    %p35 = scmp.eq.s32.totalorder %s15, 0
    %p36 = por %p34, %p35
    %p37 = scmp.ne.s32.totalorder %s23, %s24
    %p38 = scmp.eq.s32.totalorder %s16, 1
    %p39 = por %p37, %p38
    %p41 = scmp.ne.s32.totalorder %s24, %s40
    %p42 = scmp.eq.s32.totalorder %s16, 0
    %p43 = por %p41, %p42
    %s45 = sadd.s32 %s44, 1
    %p48 = scmp.eq.s32.totalorder %s10, 1
    %p49 = scmp.ne.s32.totalorder %s44, %s46
    %p50 = scmp.eq.s32.totalorder %s10, 0
    %p51 = por %p49, %p50
    %p52 = scmp.ne.s32.totalorder %s44, %s46
    %p53 = scmp.eq.s32.totalorder %s15, 1
    %p54 = por %p52, %p53
    %p55 = scmp.ne.s32.totalorder %s46, %s47
    %p56 = scmp.eq.s32.totalorder %s15, 0
    %p57 = por %p55, %p56
    %p58 = scmp.ne.s32.totalorder %s46, %s47
    %p59 = scmp.eq.s32.totalorder %s16, 1
    %p60 = por %p58, %p59
    %p62 = scmp.ne.s32.totalorder %s47, %s61
    %p63 = scmp.eq.s32.totalorder %s16, 0
    %p64 = por %p62, %p63
    %s66 = sadd.s32 %s65, 1
    %p69 = scmp.eq.s32.totalorder %s10, 1
    %p70 = scmp.ne.s32.totalorder %s65, %s67
    %p71 = scmp.eq.s32.totalorder %s10, 0
    %p72 = por %p70, %p71
    %p73 = scmp.ne.s32.totalorder %s65, %s67
    %p74 = scmp.eq.s32.totalorder %s15, 1
    %p75 = por %p73, %p74
    %p76 = scmp.ne.s32.totalorder %s67, %s68
    %p77 = scmp.eq.s32.totalorder %s15, 0
    %p78 = por %p76, %p77
    %p79 = scmp.ne.s32.totalorder %s67, %s68
    %p80 = scmp.eq.s32.totalorder %s16, 1
    %p81 = por %p79, %p80
    %p83 = scmp.ne.s32.totalorder %s68, %s82
    %p84 = scmp.eq.s32.totalorder %s16, 0
    %p85 = por %p83, %p84
    %s86 = ssub.s32 %s10, %s17
    %p87 = scmp.eq.s32.totalorder %s86, 0
    %s89 = sadd.s32 %s88, 1
    %s90 = scalar_select %p87, %s88, %s89
    %p93 = pneg %p87
    %p94 = scmp.eq.s32.totalorder %s10, 1
    %p95 = por %p93, %p94
    %p96 = scmp.ne.s32.totalorder %s88, %s91
    %p97 = scmp.eq.s32.totalorder %s10, 0
    %p98 = por %p96, %p97
    %p99 = scmp.ne.s32.totalorder %s88, %s91
    %p100 = scmp.eq.s32.totalorder %s15, 1
    %p101 = por %p99, %p100
    %p102 = scmp.ne.s32.totalorder %s91, %s92
    %p103 = scmp.eq.s32.totalorder %s15, 0
    %p104 = por %p102, %p103
    %p105 = scmp.ne.s32.totalorder %s91, %s92
    %p106 = scmp.eq.s32.totalorder %s16, 1
    %p107 = por %p105, %p106
    %p109 = scmp.ne.s32.totalorder %s92, %s108
    %p110 = scmp.eq.s32.totalorder %s16, 0
    %p111 = por %p109, %p110
    %s112 = ssub.s32 %s10, %s17
    %p113 = scmp.eq.s32.totalorder %s112, 0
    %s115 = sadd.s32 %s114, 1
    %s116 = scalar_select %p113, %s114, %s115
    %p119 = pneg %p113
    %p120 = scmp.eq.s32.totalorder %s10, 1
    %p121 = por %p119, %p120
    %p122 = scmp.ne.s32.totalorder %s114, %s117
    %p123 = scmp.eq.s32.totalorder %s10, 0
    %p124 = por %p122, %p123
    %p125 = scmp.ne.s32.totalorder %s114, %s117
    %p126 = scmp.eq.s32.totalorder %s15, 1
    %p127 = por %p125, %p126
    %p128 = scmp.ne.s32.totalorder %s117, %s118
    %p129 = scmp.eq.s32.totalorder %s15, 0
    %p130 = por %p128, %p129
    %p131 = scmp.ne.s32.totalorder %s117, %s118
    %p132 = scmp.eq.s32.totalorder %s16, 1
    %p133 = por %p131, %p132
    %p135 = scmp.ne.s32.totalorder %s118, %s134
    %p136 = scmp.eq.s32.totalorder %s16, 0
    %p137 = por %p135, %p136
    %p138 = scmp.le.s32.totalorder 1, %s10
    %p139 = scmp.lt.s32.totalorder %s10, 3
    %p140 = pnand %p138, %p139
    %p141 = pneg %p140
    // Predicated region
    $region9: #{down_conv_block_forward.11} parent=5 // pred_check
      _
    $region10: #{down_conv_block_forward.11} parent=5 // pred_check_branch
      %143 = sbr.rel (%p140) target = $region12
    $region11: #{down_conv_block_forward.11} parent=5 // pred_region
      %s144 = ssub.s32 %s10, 1
      // Predicated region
      $region13: #{down_conv_block_forward.11} parent=11 // pred_check
        %p145 = pneg %p57
      $region14: #{down_conv_block_forward.11} parent=11 // pred_check_branch
        %147 = sbr.rel (%p145) target = $region16
      $region15: #{down_conv_block_forward.11} parent=11 // pred_region
        _
      $region16: #{down_conv_block_forward.11} parent=11 // pred_fallthru
        _
      // Predicated region
      $region17: #{down_conv_block_forward.11} parent=11 // pred_check
        %p148 = pneg %p78
      $region18: #{down_conv_block_forward.11} parent=11 // pred_check_branch
        %150 = sbr.rel (%p148) target = $region20
      $region19: #{down_conv_block_forward.11} parent=11 // pred_region
        _
      $region20: #{down_conv_block_forward.11} parent=11 // pred_fallthru
        _
    $region12: #{down_conv_block_forward.11} parent=5 // pred_fallthru
      _
    %p151 = scmp.lt.s32.totalorder %s10, 2
    // Predicated region
    $region21: #{down_conv_block_forward.11} parent=5 // pred_check
      %p152 = pneg %p151
    $region22: #{down_conv_block_forward.11} parent=5 // pred_check_branch
      %154 = sbr.rel (%p152) target = $region24
    $region23: #{down_conv_block_forward.11} parent=5 // pred_region
      // Predicated region
      $region25: #{down_conv_block_forward.11} parent=23 // pred_check
        %p155 = pneg %p30
      $region26: #{down_conv_block_forward.11} parent=23 // pred_check_branch
        %157 = sbr.rel (%p155) target = $region28
      $region27: #{down_conv_block_forward.11} parent=23 // pred_region
        %s158 = smul.u32 8, %s10
        %p159 = scmp.lt.s32.totalorder %s158, 15
        %s160 = scalar_select %p159, %s158, 15
        %s161 = smul.addr %s160, 8
        %s162 = scalar_lea.vmem %s0, %s161
        %s163 = smul.u32 8, %s10
      $region28: #{down_conv_block_forward.11} parent=23 // pred_fallthru
        _
      // Predicated region
      $region29: #{down_conv_block_forward.11} parent=23 // pred_check
        %p164 = pneg %p98
      $region30: #{down_conv_block_forward.11} parent=23 // pred_check_branch
        %166 = sbr.rel (%p164) target = $region32
      $region31: #{down_conv_block_forward.11} parent=23 // pred_region
        %s167 = smul.u32 8, %s10
        %p168 = scmp.lt.s32.totalorder %s167, 15
        %s169 = scalar_select %p168, %s167, 15
        %s170 = smul.addr %s169, 8
        %s171 = scalar_lea.vmem %s3, %s170
        %s172 = smul.u32 8, %s10
      $region32: #{down_conv_block_forward.11} parent=23 // pred_fallthru
        _
    $region24: #{down_conv_block_forward.11} parent=5 // pred_fallthru
      _
    %p173 = scmp.le.s32.totalorder 1, %s10
    %p174 = scmp.lt.s32.totalorder %s10, 3
    %p175 = pnand %p173, %p174
    %p176 = pneg %p175
    // Predicated region
    $region33: #{down_conv_block_forward.11} parent=5 // pred_check
      _
    $region34: #{down_conv_block_forward.11} parent=5 // pred_check_branch
      %178 = sbr.rel (%p175) target = $region36
    $region35: #{down_conv_block_forward.11} parent=5 // pred_region
      %s179 = ssub.s32 %s10, 1
      %s180 = smul.u32 8, %s15
      %p181 = scmp.lt.s32.totalorder %s180, 15
      %s182 = scalar_select %p181, %s180, 15
      %s183 = smul.addr %s182, 8
      %s184 = scalar_lea.vmem %s0, %s183
      %p185 = pneg %p36
      %p186 = pneg %p33
      %p187 = pneg %p57
      %p188 = pneg %p54
      %p189 = pneg %p78
      %p190 = pneg %p75
      %s191 = smul.u32 8, %s15
      %p192 = scmp.lt.s32.totalorder %s191, 15
      %s193 = scalar_select %p192, %s191, 15
      %s194 = smul.addr %s193, 8
      %s195 = scalar_lea.vmem %s3, %s194
      %p196 = pneg %p104
      %p197 = pneg %p101
      %p198 = pneg %p130
      %p199 = pneg %p127
      %s200 = smul.u32 8, %s15
      %p201 = scmp.lt.s32.totalorder %s200, 15
      %s202 = scalar_select %p201, %s200, 15
      %s203 = smul.addr %s202, 8
      %s204 = scalar_lea.vmem %s4, %s203
      %s205 = smul.u32 8, %s15
      %p206 = scmp.lt.s32.totalorder %s205, 15
      %s207 = scalar_select %p206, %s205, 15
      %s208 = smul.addr %s207, 8
      %s209 = scalar_lea.vmem %s0, %s208
      %s210 = smul.u32 8, %s15
      %s211 = smul.u32 8, %s15
      %p212 = scmp.lt.s32.totalorder %s211, 15
      %s213 = scalar_select %p212, %s211, 15
      %s214 = smul.addr %s213, 8
      %s215 = scalar_lea.vmem %s3, %s214
      %s216 = smul.u32 8, %s15
      %s217 = smul.u32 8, %s15
      %p218 = scmp.lt.s32.totalorder %s217, 15
      %s219 = scalar_select %p218, %s217, 15
      %s220 = smul.addr %s219, 8
      %s221 = scalar_lea.vmem %s4, %s220
      %s222 = smul.u32 8, %s15
      %v223 = vld [vmem:[%s209] sm:$0xff]
      %v224 = vld [vmem:[%s209 + $0x8] sm:$0xff]
      %v225 = vld [vmem:[%s209 + $0x10] sm:$0xff]
      %v226 = vld [vmem:[%s209 + $0x18] sm:$0xff]
      %v227 = vld [vmem:[%s209 + $0x20] sm:$0xff]
      %v228 = vld [vmem:[%s209 + $0x28] sm:$0xff]
      %v229 = vld [vmem:[%s209 + $0x30] sm:$0xff]
      %v230 = vld [vmem:[%s209 + $0x38] sm:$0xff]
      %v231 = vld [vmem:[%s1] sm:$0x1]
      %v233 = vperm.slane %v231, 0
      %v235 = vmul.f32 %v223, %v233
      %v236 = vmul.f32 %v224, %v233
      %v237 = vmul.f32 %v225, %v233
      %v238 = vmul.f32 %v226, %v233
      %v239 = vmul.f32 %v227, %v233
      %v240 = vmul.f32 %v228, %v233
      %v241 = vmul.f32 %v229, %v233
      %v242 = vmul.f32 %v230, %v233
      %v243 = vld [vmem:[%s2] sm:$0x1]
      %v245 = vperm.slane %v243, 0
      %v247 = vadd.f32 %v235, %v245
      %v248 = vadd.f32 %v236, %v245
      %v249 = vadd.f32 %v237, %v245
      %v250 = vadd.f32 %v238, %v245
      %v251 = vadd.f32 %v239, %v245
      %v252 = vadd.f32 %v240, %v245
      %v253 = vadd.f32 %v241, %v245
      %v254 = vadd.f32 %v242, %v245
      %v255 = vld [vmem:[%s215] sm:$0xff]
      %v256 = vld [vmem:[%s215 + $0x8] sm:$0xff]
      %v257 = vld [vmem:[%s215 + $0x10] sm:$0xff]
      %v258 = vld [vmem:[%s215 + $0x18] sm:$0xff]
      %v259 = vld [vmem:[%s215 + $0x20] sm:$0xff]
      %v260 = vld [vmem:[%s215 + $0x28] sm:$0xff]
      %v261 = vld [vmem:[%s215 + $0x30] sm:$0xff]
      %v262 = vld [vmem:[%s215 + $0x38] sm:$0xff]
      %v263 = vadd.f32 %v247, %v255
      %v264 = vadd.f32 %v248, %v256
      %v265 = vadd.f32 %v249, %v257
      %v266 = vadd.f32 %v250, %v258
      %v267 = vadd.f32 %v251, %v259
      %v268 = vadd.f32 %v252, %v260
      %v269 = vadd.f32 %v253, %v261
      %v270 = vadd.f32 %v254, %v262
      %271 = vst [vmem:[%s221] sm:$0xff] %v263
      %272 = vst [vmem:[%s221 + $0x8] sm:$0xff] %v264
      %273 = vst [vmem:[%s221 + $0x10] sm:$0xff] %v265
      %274 = vst [vmem:[%s221 + $0x18] sm:$0xff] %v266
      %275 = vst [vmem:[%s221 + $0x20] sm:$0xff] %v267
      %276 = vst [vmem:[%s221 + $0x28] sm:$0xff] %v268
      %277 = vst [vmem:[%s221 + $0x30] sm:$0xff] %v269
      %278 = vst [vmem:[%s221 + $0x38] sm:$0xff] %v270
      %s279 = smul.u32 8, %s15
      %p280 = scmp.lt.s32.totalorder %s279, 15
      %s281 = scalar_select %p280, %s279, 15
      %s282 = smul.addr %s281, 8
      %s283 = scalar_lea.vmem %s4, %s282
      // Predicated region
      $region37: #{down_conv_block_forward.11} parent=35 // pred_check
        %p284 = pneg %p127
      $region38: #{down_conv_block_forward.11} parent=35 // pred_check_branch
        %286 = sbr.rel (%p284) target = $region40
      $region39: #{down_conv_block_forward.11} parent=35 // pred_region
        %s287 = smul.u32 8, %s15
      $region40: #{down_conv_block_forward.11} parent=35 // pred_fallthru
        _
    $region36: #{down_conv_block_forward.11} parent=5 // pred_fallthru
      _
    %p288 = scmp.le.s32.totalorder 2, %s10
    // Predicated region
    $region41: #{down_conv_block_forward.11} parent=5 // pred_check
      %p289 = pneg %p288
    $region42: #{down_conv_block_forward.11} parent=5 // pred_check_branch
      %291 = sbr.rel (%p289) target = $region44
    $region43: #{down_conv_block_forward.11} parent=5 // pred_region
      %s292 = ssub.s32 %s10, 2
      // Predicated region
      $region45: #{down_conv_block_forward.11} parent=43 // pred_check
        %p293 = pneg %p133
      $region46: #{down_conv_block_forward.11} parent=43 // pred_check_branch
        %295 = sbr.rel (%p293) target = $region48
      $region47: #{down_conv_block_forward.11} parent=43 // pred_region
        %s296 = smul.u32 8, %s16
        %p297 = scmp.lt.s32.totalorder %s296, 15
        %s298 = scalar_select %p297, %s296, 15
        %s299 = smul.addr %s298, 8
        %s300 = scalar_lea.vmem %s4, %s299
      $region48: #{down_conv_block_forward.11} parent=43 // pred_fallthru
        _
    $region44: #{down_conv_block_forward.11} parent=5 // pred_fallthru
      _
  $region6: #{down_conv_block_forward.11} parent=0 // loop_footer
    %s14 = sadd.s32 1, %s10
  $region7: #{down_conv_block_forward.11} parent=0 // loop_footer_branch
    %9 = sbr.rel target = $region3
  $region8: #{down_conv_block_forward.11} parent=0 // loop_exit
    _

</llo_original>
